<compile_context>
chip_gen: v7x
topology: tpu7x:2x2x1
jax: 0.10.0
libtpu: 0.0.40
codegen_flags: <defaults>
</compile_context>

<pallas_src>
import functools
import math

import jax
import jax.numpy as jnp
from jax.experimental import pallas as pl
from jax.experimental.pallas import tpu as pltpu

_COMPUTE_DTYPE = jnp.bfloat16   # MXU operand dtype; accumulation is f32.


def _vmem_limit(args, extra_bytes=0):
    """Conservative VMEM budget: 2x (double-buffered) operand bytes + headroom."""
    b = sum(int(a.size) * a.dtype.itemsize for a in args)
    return int(min(max(2 * b + extra_bytes + (4 << 20), 32 << 20), 64 << 20))


# --------------------------------------------------------------------------
# Fused multi-head attention + residual + LayerNorm (one grid step per batch)
# --------------------------------------------------------------------------
def _mha_ln_kernel(*refs, num_heads, self_attn, eps):
    if self_attn:
        (xq_ref, mask_ref, wqkv_ref, bqkv_ref, wo_ref, bo_ref,
         g_ref, b_ref, o_ref, att_ref) = refs
    else:
        (xq_ref, xkv_ref, mask_ref, wqkv_ref, bqkv_ref, wo_ref, bo_ref,
         g_ref, b_ref, o_ref, att_ref) = refs

    h = num_heads
    cdt = wqkv_ref.dtype                       # bf16 compute dtype
    xq = xq_ref[0]                             # (Sq, D)
    Sq, D = xq.shape
    Dh = D // h
    xq_c = xq.astype(cdt)

    # --- fused QKV projection: one lane-dense matmul (K=D, N=3D) ------------
    if self_attn:
        qkv = (jnp.dot(xq_c, wqkv_ref[...], preferred_element_type=jnp.float32)
               + bqkv_ref[...])                                # (Sq, 3D) f32
        q_all, k_all, v_all = qkv[:, :D], qkv[:, D:2 * D], qkv[:, 2 * D:]
        Sk = Sq
    else:
        xkv = xkv_ref[0]                                       # (Sk, D)
        Sk = xkv.shape[0]
        xkv_c = xkv.astype(cdt)
        q_all = (jnp.dot(xq_c, wqkv_ref[:, :D],
                         preferred_element_type=jnp.float32) + bqkv_ref[:, :D])
        kv = (jnp.dot(xkv_c, wqkv_ref[:, D:],
                      preferred_element_type=jnp.float32) + bqkv_ref[:, D:])
        k_all, v_all = kv[:, :D], kv[:, D:]

    q_all = q_all.astype(cdt)                  # scale already folded into wq/bq
    k_all = k_all.astype(cdt)
    v_all = v_all.astype(cdt)

    # hoist the mask broadcast out of the head loop (shared by all heads)
    mask = jnp.broadcast_to(mask_ref[0], (Sq, Sk))             # f32 additive

    # --- per-head scores / softmax / PV ; output goes to the VMEM slab ------
    # TODO(synk): for h >= 8 convert this static unroll to lax.fori_loop with
    # dynamic head slices to bound vreg live ranges; per-iteration state here
    # is only the (Sq, Sk) score tile since o_j is stored straight to att_ref.
    for j in range(h):
        lo = j * Dh
        q = q_all[:, lo:lo + Dh]
        k = k_all[:, lo:lo + Dh]
        v = v_all[:, lo:lo + Dh]
        # transposed contraction: no k.T materialization
        s = jax.lax.dot_general(q, k, (((1,), (1,)), ((), ())),
                                preferred_element_type=jnp.float32) + mask
        s = s - jnp.max(s, axis=-1, keepdims=True)
        p = jnp.exp(s)
        l = jnp.sum(p, axis=-1, keepdims=True)
        # normalize the small (Sq, Dh) PV result, not the (Sq, Sk) probs
        att_ref[:, lo:lo + Dh] = jnp.dot(
            p.astype(cdt), v, preferred_element_type=jnp.float32) / l

    # --- single concatenated output projection (head reduction on the MXU) --
    att = att_ref[...].astype(cdt)                             # (Sq, D)
    proj = (jnp.dot(att, wo_ref[...], preferred_element_type=jnp.float32)
            + bo_ref[...])

    # --- residual + LayerNorm (post-LN), f32 ---------------------------------
    y = xq.astype(jnp.float32) + proj
    mu = jnp.mean(y, axis=-1, keepdims=True)
    var = jnp.mean((y - mu) ** 2, axis=-1, keepdims=True)
    y = (y - mu) * jax.lax.rsqrt(var + eps)
    o_ref[0] = (y * g_ref[...] + b_ref[...]).astype(o_ref.dtype)


def mha_ln(x_q, x_kv, add_mask, ap, ln_g, ln_b, num_heads, self_attn):
    """LayerNorm(x_q + MHA(x_q, x_kv, x_kv, mask)) in a single pallas_call."""
    B, Sq, D = x_q.shape
    Sk = Sq if self_attn else x_kv.shape[1]
    Mq = add_mask.shape[1]                   # 1 (key-only) or Sq (causal)
    cdt = _COMPUTE_DTYPE

    in_specs = [pl.BlockSpec((1, Sq, D), lambda i: (i, 0, 0))]
    args = [x_q]
    if not self_attn:
        in_specs.append(pl.BlockSpec((1, Sk, D), lambda i: (i, 0, 0)))
        args.append(x_kv)
    # additive mask shared across heads: just pick the batch row
    in_specs.append(pl.BlockSpec((1, Mq, Sk), lambda i: (i, 0, 0)))
    args.append(add_mask)

    in_specs += [
        pl.BlockSpec((D, 3 * D), lambda i: (0, 0)),     # wqkv (head-major slab)
        pl.BlockSpec((1, 3 * D), lambda i: (0, 0)),     # bqkv
        pl.BlockSpec((D, D), lambda i: (0, 0)),         # wo
        pl.BlockSpec((1, D), lambda i: (0, 0)),         # bo
        pl.BlockSpec((1, D), lambda i: (0, 0)),         # ln gamma
        pl.BlockSpec((1, D), lambda i: (0, 0)),         # ln beta
    ]
    args += [ap["wqkv"].astype(cdt), ap["bqkv"], ap["wo"].astype(cdt),
             ap["bo"].reshape(1, D), ln_g.reshape(1, D), ln_b.reshape(1, D)]

    kernel = functools.partial(_mha_ln_kernel, num_heads=num_heads,
                               self_attn=self_attn, eps=1e-5)
    # TODO(synk): for long sequences on v7x (64 MiB VMEM) tile over Sq with an
    # online-softmax Sk axis instead of holding whole (Sq,Sk) scores per head.
    return pl.pallas_call(
        kernel,
        out_shape=jax.ShapeDtypeStruct((B, Sq, D), x_q.dtype),
        grid=(B,),
        in_specs=in_specs,
        out_specs=pl.BlockSpec((1, Sq, D), lambda i: (i, 0, 0)),
        scratch_shapes=[pltpu.VMEM((Sq, D), jnp.float32)],     # per-head slab
        compiler_params=pltpu.CompilerParams(
            dimension_semantics=("parallel",),
            vmem_limit_bytes=_vmem_limit(args, extra_bytes=8 * Sq * (D + Sk))),
    )(*args)


# --------------------------------------------------------------------------
# Fused feed-forward (w1 + ReLU + w2) + residual + LayerNorm, row-tiled grid
# --------------------------------------------------------------------------
def _ffn_ln_kernel(x_ref, w1_ref, b1_ref, w2_ref, b2_ref, g_ref, b_ref, o_ref, *, eps):
    x = x_ref[...]
    cdt = w1_ref.dtype
    hdn = (jnp.dot(x.astype(cdt), w1_ref[...],
                   preferred_element_type=jnp.float32) + b1_ref[...])
    hdn = jnp.maximum(hdn, 0.0)
    f = (jnp.dot(hdn.astype(cdt), w2_ref[...],
                 preferred_element_type=jnp.float32) + b2_ref[...])
    y = x.astype(jnp.float32) + f
    mu = jnp.mean(y, axis=-1, keepdims=True)
    var = jnp.mean((y - mu) ** 2, axis=-1, keepdims=True)
    y = (y - mu) * jax.lax.rsqrt(var + eps)
    o_ref[...] = (y * g_ref[...] + b_ref[...]).astype(o_ref.dtype)


def ffn_ln(x2d, w1, b1, w2, b2, g, b, eps=1e-5):
    M, D = x2d.shape
    Hff = w1.shape[1]
    cdt = _COMPUTE_DTYPE
    # Row tile: 512-row cap keeps the (TM, Hff) ReLU intermediate well inside
    # VMEM (also on v7x); grid uses cdiv so ragged row counts never fall back
    # to one giant all-rows tile (Pallas masks the partial boundary block).
    TM = min(M, 512)
    args = [x2d, w1.astype(cdt), b1.reshape(1, -1), w2.astype(cdt),
            b2.reshape(1, -1), g.reshape(1, -1), b.reshape(1, -1)]
    # TODO(synk): for large Hff (v7x) add a K-tiled Hff grid axis with an f32
    # accumulator scratch to cut per-step weight residency.
    return pl.pallas_call(
        functools.partial(_ffn_ln_kernel, eps=eps),
        out_shape=jax.ShapeDtypeStruct((M, D), x2d.dtype),
        grid=(pl.cdiv(M, TM),),
        in_specs=[
            pl.BlockSpec((TM, D), lambda i: (i, 0)),
            pl.BlockSpec((D, Hff), lambda i: (0, 0)),
            pl.BlockSpec((1, Hff), lambda i: (0, 0)),
            pl.BlockSpec((Hff, D), lambda i: (0, 0)),
            pl.BlockSpec((1, D), lambda i: (0, 0)),
            pl.BlockSpec((1, D), lambda i: (0, 0)),
            pl.BlockSpec((1, D), lambda i: (0, 0)),
        ],
        out_specs=pl.BlockSpec((TM, D), lambda i: (i, 0)),
        compiler_params=pltpu.CompilerParams(
            dimension_semantics=("parallel",),
            vmem_limit_bytes=_vmem_limit(args, extra_bytes=8 * TM * Hff)),
    )(*args)


# --------------------------------------------------------------------------
# Fused head: dec.mean(1) -> linear1 -> Mlp(fc1, GELU, fc2)
# --------------------------------------------------------------------------
def _head_kernel(dec_ref, w1_ref, b1_ref, wf1_ref, bf1_ref, wf2_ref, bf2_ref, o_ref):
    cdt = w1_ref.dtype
    # dec.mean(1) computed in VMEM (no pooling matrix, no extra HBM traffic).
    pooled = jnp.mean(dec_ref[...].astype(jnp.float32), axis=1)              # (B, D)
    z = (jnp.dot(pooled.astype(cdt), w1_ref[...],
                 preferred_element_type=jnp.float32) + b1_ref[...])          # linear1
    z = (jnp.dot(z.astype(cdt), wf1_ref[...],
                 preferred_element_type=jnp.float32) + bf1_ref[...])         # Mlp.fc1
    # TODO(synk): nn.GELU() defaults to the exact erf form; tanh-approx GELU is
    # used since erf lowering support in Mosaic is not guaranteed.
    z = jax.nn.gelu(z, approximate=True)
    z = (jnp.dot(z.astype(cdt), wf2_ref[...],
                 preferred_element_type=jnp.float32) + bf2_ref[...])         # Mlp.fc2
    o_ref[...] = z.astype(o_ref.dtype)


def head(dec, w1, b1, wf1, bf1, wf2, bf2):
    B, S, D = dec.shape
    out_w = wf2.shape[1]                       # 1
    lane_pad = 128                             # lane-dense output slab
    cdt = _COMPUTE_DTYPE
    wf2_p = jnp.zeros((wf2.shape[0], lane_pad), wf2.dtype).at[:, :out_w].set(wf2)
    bf2_p = jnp.zeros((lane_pad,), bf2.dtype).at[:out_w].set(bf2)
    out = pl.pallas_call(
        _head_kernel,
        out_shape=jax.ShapeDtypeStruct((B, lane_pad), dec.dtype),
        in_specs=[pl.BlockSpec(memory_space=pltpu.MemorySpace.VMEM)] * 7,
        out_specs=pl.BlockSpec(memory_space=pltpu.MemorySpace.VMEM),
    )(dec, w1.astype(cdt), b1.reshape(1, -1), wf1.astype(cdt),
      bf1.reshape(1, -1), wf2_p.astype(cdt), bf2_p.reshape(1, -1))
    return out[:, :out_w]                      # slice the padded lanes outside


# --------------------------------------------------------------------------
# Transformer glue (embedding gather / mask construction stay in plain JAX)
# --------------------------------------------------------------------------
def encoder_layer(p, x, add_mask, h):
    B, S, D = x.shape
    x = mha_ln(x, x, add_mask, p["attn"], p["ln1_g"], p["ln1_b"], h, self_attn=True)
    f = ffn_ln(x.reshape(B * S, D), p["ff_w1"], p["ff_b1"], p["ff_w2"], p["ff_b2"],
               p["ln2_g"], p["ln2_b"])
    return f.reshape(B, S, D)


def decoder_layer(p, y, enc, self_add, cross_add, h):
    B, S, D = y.shape
    y = mha_ln(y, y, self_add, p["self_attn"], p["ln1_g"], p["ln1_b"], h, self_attn=True)
    y = mha_ln(y, enc, cross_add, p["cross_attn"], p["ln2_g"], p["ln2_b"], h, self_attn=False)
    f = ffn_ln(y.reshape(B * S, D), p["ff_w1"], p["ff_b1"], p["ff_w2"], p["ff_b2"],
               p["ln3_g"], p["ln3_b"])
    return f.reshape(B, S, D)


def transformer_qe_forward(params, cfg, src, trg, src_padding_mask,
                           trg_padding_mask, peek_mask):
    D, h = cfg["dim_model"], cfg["h"]
    # linear1 is nn.Linear(mlp_hidden, mlp_hidden) applied to the (B, D) pooled
    # decoder output, so the original module only works when mlp_hidden == D.
    assert cfg["mlp_hidden"] == D, "TransformerQE requires mlp_hidden == dim_model"
    B, S_src = src.shape
    _, S_trg = trg.shape

    # TokenEmbedding (* sqrt(D)) + PositionalEncoding; dropout = identity.
    src_emb = params["src_emb"][src] * math.sqrt(D) + params["pe"][:S_src]
    trg_emb = params["trg_emb"][trg] * math.sqrt(D) + params["pe"][:S_trg]

    # Additive masks (no per-head blow-up); -1e9 fill instead of -inf so fully
    # masked rows give a uniform distribution rather than NaN.
    enc_add = jnp.where(src_padding_mask[:, None, :], 0.0, -1e9).astype(jnp.float32)  # (B,1,S_src)
    cross_add = enc_add
    dec_self_add = jnp.where(trg_padding_mask[:, None, :] & peek_mask[None, :, :],
                             0.0, -1e9).astype(jnp.float32)                           # (B,S_trg,S_trg)

    x = src_emb
    for p in params["encoder"]:
        x = encoder_layer(p, x, enc_add, h)
    enc = x

    y = trg_emb
    for p in params["decoder"]:
        y = decoder_layer(p, y, enc, dec_self_add, cross_add, h)

    return head(y, params["linear1_w"], params["linear1_b"],
                params["fc1_w"], params["fc1_b"],
                params["fc2_w"], params["fc2_b"])


# --------------------------------------------------------------------------
# Deterministic parameter initialization
# --------------------------------------------------------------------------
def dense_params(key, din, dout):
    kw, kb = jax.random.split(key)
    w = jax.random.normal(kw, (din, dout), jnp.float32) * 0.02
    b = jax.random.normal(kb, (dout,), jnp.float32) * 0.02
    return w, b


def sinusoidal_pe(max_len, d):
    pos = jnp.arange(max_len, dtype=jnp.float32)[:, None]
    div = jnp.exp(jnp.arange(0, d, 2, dtype=jnp.float32) * (-math.log(10000.0) / d))
    pe = jnp.zeros((max_len, d), jnp.float32)
    pe = pe.at[:, 0::2].set(jnp.sin(pos * div))
    pe = pe.at[:, 1::2].set(jnp.cos(pos * div))
    return pe


def attn_params(key, D, h):
    """Q/K/V stored as one head-major (D, 3D) slab; the 1/sqrt(Dh) attention
    scale is folded into the Q weights/bias (mathematically equivalent)."""
    Dh = D // h
    scale = 1.0 / math.sqrt(Dh)
    ks = jax.random.split(key, 4)
    wq, bq = dense_params(ks[0], D, D)
    wk, bk = dense_params(ks[1], D, D)
    wv, bv = dense_params(ks[2], D, D)
    wo, bo = dense_params(ks[3], D, D)
    wqkv = jnp.concatenate([wq * scale, wk, wv], axis=1)          # (D, 3D)
    bqkv = jnp.concatenate([bq * scale, bk, bv])[None, :]         # (1, 3D)
    return {"wqkv": wqkv, "bqkv": bqkv, "wo": wo, "bo": bo}


def init_params(key, cfg, max_len=64):
    D, Hff, mh, h, N = (cfg["dim_model"], cfg["dim_hidden"], cfg["mlp_hidden"],
                        cfg["h"], cfg["N"])
    ks = iter(jax.random.split(key, 5 + 5 * N))
    params = {
        "src_emb": jax.random.normal(next(ks), (cfg["src_vocab"], D), jnp.float32) * 0.02,
        "trg_emb": jax.random.normal(next(ks), (cfg["trg_vocab"], D), jnp.float32) * 0.02,
        "pe": sinusoidal_pe(max_len, D),
        "encoder": [],
        "decoder": [],
    }
    for _ in range(N):
        p = {"attn": attn_params(next(ks), D, h)}
        kf = next(ks)
        p["ff_w1"], p["ff_b1"] = dense_params(kf, D, Hff)
        p["ff_w2"], p["ff_b2"] = dense_params(jax.random.fold_in(kf, 1), Hff, D)
        for n in ("ln1", "ln2"):
            p[n + "_g"], p[n + "_b"] = jnp.ones((D,), jnp.float32), jnp.zeros((D,), jnp.float32)
        params["encoder"].append(p)
    for _ in range(N):
        p = {"self_attn": attn_params(next(ks), D, h),
             "cross_attn": attn_params(next(ks), D, h)}
        kf = next(ks)
        p["ff_w1"], p["ff_b1"] = dense_params(kf, D, Hff)
        p["ff_w2"], p["ff_b2"] = dense_params(jax.random.fold_in(kf, 1), Hff, D)
        for n in ("ln1", "ln2", "ln3"):
            p[n + "_g"], p[n + "_b"] = jnp.ones((D,), jnp.float32), jnp.zeros((D,), jnp.float32)
        params["decoder"].append(p)
    # head: linear1(mlp_hidden, mlp_hidden), Mlp(dim_model, 2*mlp_hidden, 1)
    params["linear1_w"], params["linear1_b"] = dense_params(next(ks), mh, mh)
    params["fc1_w"], params["fc1_b"] = dense_params(next(ks), D, 2 * mh)
    params["fc2_w"], params["fc2_b"] = dense_params(next(ks), 2 * mh, 1)
    return params


# --------------------------------------------------------------------------
if __name__ == "__main__":
    cfg = dict(dim_model=32, dim_hidden=64, src_vocab=50, trg_vocab=60,
               mlp_hidden=32, N=2, h=4)
    B, S_src, S_trg = 2, 8, 8

    key = jax.random.PRNGKey(0)
    k_params, k_src, k_trg = jax.random.split(key, 3)
    params = init_params(k_params, cfg, max_len=64)

    src = jax.random.randint(k_src, (B, S_src), 0, cfg["src_vocab"])
    trg = jax.random.randint(k_trg, (B, S_trg), 0, cfg["trg_vocab"])
    src_padding_mask = jnp.array([[True] * 8, [True] * 6 + [False] * 2])
    trg_padding_mask = jnp.array([[True] * 7 + [False], [True] * 8])
    peek_mask = jnp.tril(jnp.ones((S_trg, S_trg), dtype=bool))

    out = transformer_qe_forward(params, cfg, src, trg,
                                 src_padding_mask, trg_padding_mask, peek_mask)
    out = jax.block_until_ready(out)
    assert out.shape == (B, 1) and out.dtype == jnp.float32
    print("KERNEL_OK")
</pallas_src>

<mosaic_0001>
module attributes {stable_mosaic.version = 11 : i64} {
  func.func @_mha_ln_kernel(%arg0: i32, %arg1: memref<1x8x32xf32, #tpu.memory_space<vmem>>, %arg2: memref<1x1x8xf32, #tpu.memory_space<vmem>>, %arg3: memref<32x96xbf16, #tpu.memory_space<vmem>>, %arg4: memref<1x96xf32, #tpu.memory_space<vmem>>, %arg5: memref<32x32xbf16, #tpu.memory_space<vmem>>, %arg6: memref<1x32xf32, #tpu.memory_space<vmem>>, %arg7: memref<1x32xf32, #tpu.memory_space<vmem>>, %arg8: memref<1x32xf32, #tpu.memory_space<vmem>>, %arg9: memref<1x8x32xf32, #tpu.memory_space<vmem>>, %arg10: memref<8x32xf32, #tpu.memory_space<vmem>>) attributes {dimension_semantics = [#tpu.dimension_semantics<parallel>], iteration_bounds = array<i64: 2>, scalar_prefetch = 0 : i64, scratch_operands = 1 : i64, tpu.core_type = #tpu.core_type<tc>, window_params = [{transform_indices = @transform_0, window_bounds = array<i64: 1, 8, 32>}, {transform_indices = @transform_1, window_bounds = array<i64: 1, 1, 8>}, {pipeline_mode = #tpu.pipeline_mode<synchronous>, transform_indices = @transform_2, window_bounds = array<i64: 32, 96>}, {pipeline_mode = #tpu.pipeline_mode<synchronous>, transform_indices = @transform_3, window_bounds = array<i64: 1, 96>}, {pipeline_mode = #tpu.pipeline_mode<synchronous>, transform_indices = @transform_4, window_bounds = array<i64: 32, 32>}, {pipeline_mode = #tpu.pipeline_mode<synchronous>, transform_indices = @transform_5, window_bounds = array<i64: 1, 32>}, {pipeline_mode = #tpu.pipeline_mode<synchronous>, transform_indices = @transform_6, window_bounds = array<i64: 1, 32>}, {pipeline_mode = #tpu.pipeline_mode<synchronous>, transform_indices = @transform_7, window_bounds = array<i64: 1, 32>}, {transform_indices = @transform_8, window_bounds = array<i64: 1, 8, 32>}]} {
    %c0 = arith.constant 0 : index
    %c0_0 = arith.constant 0 : index
    %c0_1 = arith.constant 0 : index
    %0 = vector.load %arg1[%c0, %c0_0, %c0_1] : memref<1x8x32xf32, #tpu.memory_space<vmem>>, vector<1x8x32xf32>
    %1 = vector.shape_cast %0 : vector<1x8x32xf32> to vector<8x32xf32>
    %2 = arith.truncf %1 : vector<8x32xf32> to vector<8x32xbf16>
    %c0_2 = arith.constant 0 : index
    %c0_3 = arith.constant 0 : index
    %3 = vector.load %arg3[%c0_2, %c0_3] : memref<32x96xbf16, #tpu.memory_space<vmem>>, vector<32x96xbf16>
    %cst = arith.constant dense<0.000000e+00> : vector<8x96xf32>
    %4 = tpu.matmul %2, %3, %cst {dimension_numbers = #tpu.dot_dimension_numbers<[1], [0], [0], [1], [0, 0, 1, 1], [], []>} : vector<8x32xbf16>, vector<32x96xbf16>, vector<8x96xf32> -> vector<8x96xf32>
    %c0_4 = arith.constant 0 : index
    %c0_5 = arith.constant 0 : index
    %5 = vector.load %arg4[%c0_4, %c0_5] : memref<1x96xf32, #tpu.memory_space<vmem>>, vector<1x96xf32>
    %6 = vector.broadcast %5 : vector<1x96xf32> to vector<8x96xf32>
    %7 = arith.addf %4, %6 : vector<8x96xf32>
    %8 = vector.extract_strided_slice %7 {offsets = [0, 0], sizes = [8, 32], strides = [1, 1]} : vector<8x96xf32> to vector<8x32xf32>
    %9 = vector.extract_strided_slice %7 {offsets = [0, 32], sizes = [8, 32], strides = [1, 1]} : vector<8x96xf32> to vector<8x32xf32>
    %10 = vector.extract_strided_slice %7 {offsets = [0, 64], sizes = [8, 32], strides = [1, 1]} : vector<8x96xf32> to vector<8x32xf32>
    %11 = arith.truncf %8 : vector<8x32xf32> to vector<8x32xbf16>
    %12 = arith.truncf %9 : vector<8x32xf32> to vector<8x32xbf16>
    %13 = arith.truncf %10 : vector<8x32xf32> to vector<8x32xbf16>
    %c0_6 = arith.constant 0 : index
    %c0_7 = arith.constant 0 : index
    %c0_8 = arith.constant 0 : index
    %14 = vector.load %arg2[%c0_6, %c0_7, %c0_8] : memref<1x1x8xf32, #tpu.memory_space<vmem>>, vector<1x1x8xf32>
    %15 = vector.shape_cast %14 : vector<1x1x8xf32> to vector<1x8xf32>
    %16 = vector.shape_cast %15 : vector<1x8xf32> to vector<1x8xf32>
    %17 = vector.broadcast %16 : vector<1x8xf32> to vector<8x8xf32>
    %18 = vector.extract_strided_slice %11 {offsets = [0, 0], sizes = [8, 8], strides = [1, 1]} : vector<8x32xbf16> to vector<8x8xbf16>
    %19 = vector.extract_strided_slice %12 {offsets = [0, 0], sizes = [8, 8], strides = [1, 1]} : vector<8x32xbf16> to vector<8x8xbf16>
    %20 = vector.extract_strided_slice %13 {offsets = [0, 0], sizes = [8, 8], strides = [1, 1]} : vector<8x32xbf16> to vector<8x8xbf16>
    %cst_9 = arith.constant dense<0.000000e+00> : vector<8x8xf32>
    %21 = tpu.matmul %18, %19, %cst_9 {dimension_numbers = #tpu.dot_dimension_numbers<[1], [1], [0], [0], [0, 0, 1, 0], [], []>} : vector<8x8xbf16>, vector<8x8xbf16>, vector<8x8xf32> -> vector<8x8xf32>
    %22 = arith.addf %21, %17 : vector<8x8xf32>
    %cst_10 = arith.constant dense<0xFF800000> : vector<8xf32>
    %23 = vector.multi_reduction <maximumf>, %22, %cst_10 [1] : vector<8x8xf32> to vector<8xf32>
    %24 = vector.shape_cast %23 : vector<8xf32> to vector<8x1xf32>
    %25 = vector.broadcast %24 : vector<8x1xf32> to vector<8x8xf32>
    %26 = arith.subf %22, %25 : vector<8x8xf32>
    %27 = math.exp %26 : vector<8x8xf32>
    %cst_11 = arith.constant dense<0.000000e+00> : vector<8xf32>
    %28 = vector.multi_reduction <add>, %27, %cst_11 [1] : vector<8x8xf32> to vector<8xf32>
    %29 = vector.shape_cast %28 : vector<8xf32> to vector<8x1xf32>
    %30 = arith.truncf %27 : vector<8x8xf32> to vector<8x8xbf16>
    %cst_12 = arith.constant dense<0.000000e+00> : vector<8x8xf32>
    %31 = tpu.matmul %30, %20, %cst_12 {dimension_numbers = #tpu.dot_dimension_numbers<[1], [0], [0], [1], [0, 0, 1, 1], [], []>} : vector<8x8xbf16>, vector<8x8xbf16>, vector<8x8xf32> -> vector<8x8xf32>
    %32 = vector.broadcast %29 : vector<8x1xf32> to vector<8x8xf32>
    %33 = arith.divf %31, %32 : vector<8x8xf32>
    %c0_13 = arith.constant 0 : index
    %c0_14 = arith.constant 0 : index
    %34 = vector.load %arg10[%c0_13, %c0_14] : memref<8x32xf32, #tpu.memory_space<vmem>>, vector<8x8xf32>
    tpu.vector_store %arg10[%c0_13, %c0_14], %33 {strides = array<i32>} : memref<8x32xf32, #tpu.memory_space<vmem>>, vector<8x8xf32>,
    %35 = vector.extract_strided_slice %11 {offsets = [0, 8], sizes = [8, 8], strides = [1, 1]} : vector<8x32xbf16> to vector<8x8xbf16>
    %36 = vector.extract_strided_slice %12 {offsets = [0, 8], sizes = [8, 8], strides = [1, 1]} : vector<8x32xbf16> to vector<8x8xbf16>
    %37 = vector.extract_strided_slice %13 {offsets = [0, 8], sizes = [8, 8], strides = [1, 1]} : vector<8x32xbf16> to vector<8x8xbf16>
    %cst_15 = arith.constant dense<0.000000e+00> : vector<8x8xf32>
    %38 = tpu.matmul %35, %36, %cst_15 {dimension_numbers = #tpu.dot_dimension_numbers<[1], [1], [0], [0], [0, 0, 1, 0], [], []>} : vector<8x8xbf16>, vector<8x8xbf16>, vector<8x8xf32> -> vector<8x8xf32>
    %39 = arith.addf %38, %17 : vector<8x8xf32>
    %cst_16 = arith.constant dense<0xFF800000> : vector<8xf32>
    %40 = vector.multi_reduction <maximumf>, %39, %cst_16 [1] : vector<8x8xf32> to vector<8xf32>
    %41 = vector.shape_cast %40 : vector<8xf32> to vector<8x1xf32>
    %42 = vector.broadcast %41 : vector<8x1xf32> to vector<8x8xf32>
    %43 = arith.subf %39, %42 : vector<8x8xf32>
    %44 = math.exp %43 : vector<8x8xf32>
    %cst_17 = arith.constant dense<0.000000e+00> : vector<8xf32>
    %45 = vector.multi_reduction <add>, %44, %cst_17 [1] : vector<8x8xf32> to vector<8xf32>
    %46 = vector.shape_cast %45 : vector<8xf32> to vector<8x1xf32>
    %47 = arith.truncf %44 : vector<8x8xf32> to vector<8x8xbf16>
    %cst_18 = arith.constant dense<0.000000e+00> : vector<8x8xf32>
    %48 = tpu.matmul %47, %37, %cst_18 {dimension_numbers = #tpu.dot_dimension_numbers<[1], [0], [0], [1], [0, 0, 1, 1], [], []>} : vector<8x8xbf16>, vector<8x8xbf16>, vector<8x8xf32> -> vector<8x8xf32>
    %49 = vector.broadcast %46 : vector<8x1xf32> to vector<8x8xf32>
    %50 = arith.divf %48, %49 : vector<8x8xf32>
    %c0_19 = arith.constant 0 : index
    %c8 = arith.constant 8 : index
    %51 = vector.load %arg10[%c0_19, %c8] : memref<8x32xf32, #tpu.memory_space<vmem>>, vector<8x8xf32>
    tpu.vector_store %arg10[%c0_19, %c8], %50 {strides = array<i32>} : memref<8x32xf32, #tpu.memory_space<vmem>>, vector<8x8xf32>,
    %52 = vector.extract_strided_slice %11 {offsets = [0, 16], sizes = [8, 8], strides = [1, 1]} : vector<8x32xbf16> to vector<8x8xbf16>
    %53 = vector.extract_strided_slice %12 {offsets = [0, 16], sizes = [8, 8], strides = [1, 1]} : vector<8x32xbf16> to vector<8x8xbf16>
    %54 = vector.extract_strided_slice %13 {offsets = [0, 16], sizes = [8, 8], strides = [1, 1]} : vector<8x32xbf16> to vector<8x8xbf16>
    %cst_20 = arith.constant dense<0.000000e+00> : vector<8x8xf32>
    %55 = tpu.matmul %52, %53, %cst_20 {dimension_numbers = #tpu.dot_dimension_numbers<[1], [1], [0], [0], [0, 0, 1, 0], [], []>} : vector<8x8xbf16>, vector<8x8xbf16>, vector<8x8xf32> -> vector<8x8xf32>
    %56 = arith.addf %55, %17 : vector<8x8xf32>
    %cst_21 = arith.constant dense<0xFF800000> : vector<8xf32>
    %57 = vector.multi_reduction <maximumf>, %56, %cst_21 [1] : vector<8x8xf32> to vector<8xf32>
    %58 = vector.shape_cast %57 : vector<8xf32> to vector<8x1xf32>
    %59 = vector.broadcast %58 : vector<8x1xf32> to vector<8x8xf32>
    %60 = arith.subf %56, %59 : vector<8x8xf32>
    %61 = math.exp %60 : vector<8x8xf32>
    %cst_22 = arith.constant dense<0.000000e+00> : vector<8xf32>
    %62 = vector.multi_reduction <add>, %61, %cst_22 [1] : vector<8x8xf32> to vector<8xf32>
    %63 = vector.shape_cast %62 : vector<8xf32> to vector<8x1xf32>
    %64 = arith.truncf %61 : vector<8x8xf32> to vector<8x8xbf16>
    %cst_23 = arith.constant dense<0.000000e+00> : vector<8x8xf32>
    %65 = tpu.matmul %64, %54, %cst_23 {dimension_numbers = #tpu.dot_dimension_numbers<[1], [0], [0], [1], [0, 0, 1, 1], [], []>} : vector<8x8xbf16>, vector<8x8xbf16>, vector<8x8xf32> -> vector<8x8xf32>
    %66 = vector.broadcast %63 : vector<8x1xf32> to vector<8x8xf32>
    %67 = arith.divf %65, %66 : vector<8x8xf32>
    %c0_24 = arith.constant 0 : index
    %c16 = arith.constant 16 : index
    %68 = vector.load %arg10[%c0_24, %c16] : memref<8x32xf32, #tpu.memory_space<vmem>>, vector<8x8xf32>
    tpu.vector_store %arg10[%c0_24, %c16], %67 {strides = array<i32>} : memref<8x32xf32, #tpu.memory_space<vmem>>, vector<8x8xf32>,
    %69 = vector.extract_strided_slice %11 {offsets = [0, 24], sizes = [8, 8], strides = [1, 1]} : vector<8x32xbf16> to vector<8x8xbf16>
    %70 = vector.extract_strided_slice %12 {offsets = [0, 24], sizes = [8, 8], strides = [1, 1]} : vector<8x32xbf16> to vector<8x8xbf16>
    %71 = vector.extract_strided_slice %13 {offsets = [0, 24], sizes = [8, 8], strides = [1, 1]} : vector<8x32xbf16> to vector<8x8xbf16>
    %cst_25 = arith.constant dense<0.000000e+00> : vector<8x8xf32>
    %72 = tpu.matmul %69, %70, %cst_25 {dimension_numbers = #tpu.dot_dimension_numbers<[1], [1], [0], [0], [0, 0, 1, 0], [], []>} : vector<8x8xbf16>, vector<8x8xbf16>, vector<8x8xf32> -> vector<8x8xf32>
    %73 = arith.addf %72, %17 : vector<8x8xf32>
    %cst_26 = arith.constant dense<0xFF800000> : vector<8xf32>
    %74 = vector.multi_reduction <maximumf>, %73, %cst_26 [1] : vector<8x8xf32> to vector<8xf32>
    %75 = vector.shape_cast %74 : vector<8xf32> to vector<8x1xf32>
    %76 = vector.broadcast %75 : vector<8x1xf32> to vector<8x8xf32>
    %77 = arith.subf %73, %76 : vector<8x8xf32>
    %78 = math.exp %77 : vector<8x8xf32>
    %cst_27 = arith.constant dense<0.000000e+00> : vector<8xf32>
    %79 = vector.multi_reduction <add>, %78, %cst_27 [1] : vector<8x8xf32> to vector<8xf32>
    %80 = vector.shape_cast %79 : vector<8xf32> to vector<8x1xf32>
    %81 = arith.truncf %78 : vector<8x8xf32> to vector<8x8xbf16>
    %cst_28 = arith.constant dense<0.000000e+00> : vector<8x8xf32>
    %82 = tpu.matmul %81, %71, %cst_28 {dimension_numbers = #tpu.dot_dimension_numbers<[1], [0], [0], [1], [0, 0, 1, 1], [], []>} : vector<8x8xbf16>, vector<8x8xbf16>, vector<8x8xf32> -> vector<8x8xf32>
    %83 = vector.broadcast %80 : vector<8x1xf32> to vector<8x8xf32>
    %84 = arith.divf %82, %83 : vector<8x8xf32>
    %c0_29 = arith.constant 0 : index
    %c24 = arith.constant 24 : index
    %85 = vector.load %arg10[%c0_29, %c24] : memref<8x32xf32, #tpu.memory_space<vmem>>, vector<8x8xf32>
    tpu.vector_store %arg10[%c0_29, %c24], %84 {strides = array<i32>} : memref<8x32xf32, #tpu.memory_space<vmem>>, vector<8x8xf32>,
    %c0_30 = arith.constant 0 : index
    %c0_31 = arith.constant 0 : index
    %86 = vector.load %arg10[%c0_30, %c0_31] : memref<8x32xf32, #tpu.memory_space<vmem>>, vector<8x32xf32>
    %87 = arith.truncf %86 : vector<8x32xf32> to vector<8x32xbf16>
    %c0_32 = arith.constant 0 : index
    %c0_33 = arith.constant 0 : index
    %88 = vector.load %arg5[%c0_32, %c0_33] : memref<32x32xbf16, #tpu.memory_space<vmem>>, vector<32x32xbf16>
    %cst_34 = arith.constant dense<0.000000e+00> : vector<8x32xf32>
    %89 = tpu.matmul %87, %88, %cst_34 {dimension_numbers = #tpu.dot_dimension_numbers<[1], [0], [0], [1], [0, 0, 1, 1], [], []>} : vector<8x32xbf16>, vector<32x32xbf16>, vector<8x32xf32> -> vector<8x32xf32>
    %c0_35 = arith.constant 0 : index
    %c0_36 = arith.constant 0 : index
    %90 = vector.load %arg6[%c0_35, %c0_36] : memref<1x32xf32, #tpu.memory_space<vmem>>, vector<1x32xf32>
    %91 = vector.broadcast %90 : vector<1x32xf32> to vector<8x32xf32>
    %92 = arith.addf %89, %91 : vector<8x32xf32>
    %93 = arith.addf %1, %92 : vector<8x32xf32>
    %cst_37 = arith.constant dense<0.000000e+00> : vector<8xf32>
    %94 = vector.multi_reduction <add>, %93, %cst_37 [1] : vector<8x32xf32> to vector<8xf32>
    %95 = vector.shape_cast %94 : vector<8xf32> to vector<8x1xf32>
    %cst_38 = arith.constant 3.200000e+01 : f32
    %96 = vector.broadcast %cst_38 : f32 to vector<8x1xf32>
    %97 = arith.divf %95, %96 : vector<8x1xf32>
    %98 = vector.broadcast %97 : vector<8x1xf32> to vector<8x32xf32>
    %99 = arith.subf %93, %98 : vector<8x32xf32>
    %100 = arith.mulf %99, %99 : vector<8x32xf32>
    %cst_39 = arith.constant dense<0.000000e+00> : vector<8xf32>
    %101 = vector.multi_reduction <add>, %100, %cst_39 [1] : vector<8x32xf32> to vector<8xf32>
    %102 = vector.shape_cast %101 : vector<8xf32> to vector<8x1xf32>
    %cst_40 = arith.constant 3.200000e+01 : f32
    %103 = vector.broadcast %cst_40 : f32 to vector<8x1xf32>
    %104 = arith.divf %102, %103 : vector<8x1xf32>
    %105 = vector.broadcast %97 : vector<8x1xf32> to vector<8x32xf32>
    %106 = arith.subf %93, %105 : vector<8x32xf32>
    %cst_41 = arith.constant 9.99999974E-6 : f32
    %107 = vector.broadcast %cst_41 : f32 to vector<8x1xf32>
    %108 = arith.addf %104, %107 : vector<8x1xf32>
    %109 = math.rsqrt %108 : vector<8x1xf32>
    %110 = vector.broadcast %109 : vector<8x1xf32> to vector<8x32xf32>
    %111 = arith.mulf %106, %110 : vector<8x32xf32>
    %c0_42 = arith.constant 0 : index
    %c0_43 = arith.constant 0 : index
    %112 = vector.load %arg7[%c0_42, %c0_43] : memref<1x32xf32, #tpu.memory_space<vmem>>, vector<1x32xf32>
    %113 = vector.broadcast %112 : vector<1x32xf32> to vector<8x32xf32>
    %114 = arith.mulf %111, %113 : vector<8x32xf32>
    %c0_44 = arith.constant 0 : index
    %c0_45 = arith.constant 0 : index
    %115 = vector.load %arg8[%c0_44, %c0_45] : memref<1x32xf32, #tpu.memory_space<vmem>>, vector<1x32xf32>
    %116 = vector.broadcast %115 : vector<1x32xf32> to vector<8x32xf32>
    %117 = arith.addf %114, %116 : vector<8x32xf32>
    %c0_46 = arith.constant 0 : index
    %c0_47 = arith.constant 0 : index
    %c0_48 = arith.constant 0 : index
    %118 = vector.load %arg9[%c0_46, %c0_47, %c0_48] : memref<1x8x32xf32, #tpu.memory_space<vmem>>, vector<1x8x32xf32>
    %119 = vector.shape_cast %118 : vector<1x8x32xf32> to vector<8x32xf32>
    %120 = vector.shape_cast %117 : vector<8x32xf32> to vector<1x8x32xf32>
    tpu.vector_store %arg9[%c0_46, %c0_47, %c0_48], %120 {strides = array<i32>} : memref<1x8x32xf32, #tpu.memory_space<vmem>>, vector<1x8x32xf32>,
    return
  }
  func.func @transform_0(%arg0: i32) -> (i32, i32, i32) {
    %c0_i32 = arith.constant 0 : i32
    %c0_i32_0 = arith.constant 0 : i32
    %c0_i32_1 = arith.constant 0 : i32
    return %arg0, %c0_i32, %c0_i32_0 : i32, i32, i32
  }
  func.func @transform_1(%arg0: i32) -> (i32, i32, i32) {
    %c0_i32 = arith.constant 0 : i32
    %c0_i32_0 = arith.constant 0 : i32
    %c0_i32_1 = arith.constant 0 : i32
    return %arg0, %c0_i32, %c0_i32_0 : i32, i32, i32
  }
  func.func @transform_2(%arg0: i32) -> (i32, i32) {
    %c0_i32 = arith.constant 0 : i32
    %c0_i32_0 = arith.constant 0 : i32
    %c0_i32_1 = arith.constant 0 : i32
    return %c0_i32, %c0_i32_0 : i32, i32
  }
  func.func @transform_3(%arg0: i32) -> (i32, i32) {
    %c0_i32 = arith.constant 0 : i32
    %c0_i32_0 = arith.constant 0 : i32
    %c0_i32_1 = arith.constant 0 : i32
    return %c0_i32, %c0_i32_0 : i32, i32
  }
  func.func @transform_4(%arg0: i32) -> (i32, i32) {
    %c0_i32 = arith.constant 0 : i32
    %c0_i32_0 = arith.constant 0 : i32
    %c0_i32_1 = arith.constant 0 : i32
    return %c0_i32, %c0_i32_0 : i32, i32
  }
  func.func @transform_5(%arg0: i32) -> (i32, i32) {
    %c0_i32 = arith.constant 0 : i32
    %c0_i32_0 = arith.constant 0 : i32
    %c0_i32_1 = arith.constant 0 : i32
    return %c0_i32, %c0_i32_0 : i32, i32
  }
  func.func @transform_6(%arg0: i32) -> (i32, i32) {
    %c0_i32 = arith.constant 0 : i32
    %c0_i32_0 = arith.constant 0 : i32
    %c0_i32_1 = arith.constant 0 : i32
    return %c0_i32, %c0_i32_0 : i32, i32
  }
  func.func @transform_7(%arg0: i32) -> (i32, i32) {
    %c0_i32 = arith.constant 0 : i32
    %c0_i32_0 = arith.constant 0 : i32
    %c0_i32_1 = arith.constant 0 : i32
    return %c0_i32, %c0_i32_0 : i32, i32
  }
  func.func @transform_8(%arg0: i32) -> (i32, i32, i32) {
    %c0_i32 = arith.constant 0 : i32
    %c0_i32_0 = arith.constant 0 : i32
    %c0_i32_1 = arith.constant 0 : i32
    return %arg0, %c0_i32, %c0_i32_0 : i32, i32, i32
  }
}

</mosaic_0001>

<llo_original>
// kernel: tpu_custom_call.1
$region0: #{tpu_custom_call.1}
  #allocation0 [shape = 'u32[]', space=smem, size = 0x4, offset = 0x4, fixed_abs, tag = 'smem constant byte address 0x4 - core index']
  #allocation1 [shape = 'u32[144,128]{1,0:T(1,128)}', space=vmem, size = 0x12000, scoped, tag = 'internal scratch']
  #allocation2 [shape = 'f32[8,32]{1,0:T(8,128)}', space=vmem, size = 0x1000, scoped, tag = 'scratch operand']
  %s0 = inlined_call_operand.hbm [shape: f32[2,8,32], index: 0, kind: input, shape index: {}]
  %s1 = inlined_call_operand.vmem [shape: f32[2,1,8], index: 1, kind: input, shape index: {}]
  %s2 = inlined_call_operand.hbm [shape: bf16[32,96], index: 2, kind: input, shape index: {}]
  %s3 = inlined_call_operand.vmem [shape: f32[1,96], index: 3, kind: input, shape index: {}]
  %s4 = inlined_call_operand.hbm [shape: bf16[32,32], index: 4, kind: input, shape index: {}]
  %s5 = inlined_call_operand.vmem [shape: f32[1,32], index: 5, kind: input, shape index: {}]
  %s6 = inlined_call_operand.vmem [shape: f32[1,32], index: 6, kind: input, shape index: {}]
  %s7 = inlined_call_operand.vmem [shape: f32[1,32], index: 7, kind: input, shape index: {}]
  %s8 = inlined_call_operand.hbm [shape: f32[2,8,32], index: 8, kind: output, shape index: {}]
  %s9 = sld [smem:[#allocation0]]
  $region77: #{tpu_custom_call.1} parent=0
    _
  %s11 = ssub.s32 1, %s9
  %s12 = scalar_select 0, %s11, %s9
  $region1: #{tpu_custom_call.1} parent=0
    #allocation3 [shape = 'u8[8192]{0}', space=vmem, size = 0x2000, scoped, tag = 'input window, operand 0']
    #allocation4 [shape = 's32[2]{0}', space=sflag, size = 0x8, scoped, tag = 'scoped memory for tpu_custom_call.1']
    #allocation5 [shape = 's32[2]{0}', space=sflag, size = 0x8, scoped, tag = 'scoped memory for tpu_custom_call.1']
    #allocation6 [shape = 'u8[8192]{0}', space=vmem, size = 0x2000, scoped, tag = 'input window, operand 2, single buffered']
    #allocation7 [shape = 's32[1]{0}', space=sflag, size = 0x4, scoped, tag = 'scoped memory for tpu_custom_call.1']
    #allocation8 [shape = 'u8[8192]{0}', space=vmem, size = 0x2000, scoped, tag = 'input window, operand 4, single buffered']
    #allocation9 [shape = 'u8[8192]{0}', space=vmem, size = 0x2000, scoped, tag = 'output window, operand 0']
    %13 = vsyncpa [#allocation4], 0
    %s14 = scalar_lea.sflag [#allocation4], 1
    %15 = vsyncpa %s14, 0
    %16 = vsyncpa [#allocation7], 0
    %17 = vsyncpa [#allocation5], 0
    %s18 = scalar_lea.sflag [#allocation5], 1
    %19 = vsyncpa %s18, 0
    loop: start=0, step=1, limit=4
    $region2: #{tpu_custom_call.1} parent=1 // loop_pre_header
      _
    $region3: #{tpu_custom_call.1} parent=1 // loop_header
      %s21 = sphi 0, %s25
      %p22 = scmp.ge.s32.totalorder %s21, 4
      %s31 = sphi 0, %s33
      %s34 = sphi 0, %s31
      %s35 = sphi 0, %s34
      %s51 = sphi 0, %s35
      %s57 = sphi 0, %s59
      %s60 = sphi 0, %s57
      %s61 = sphi 0, %s60
      %s77 = sphi 0, %s61
      %s81 = sphi 0, %s81
      %s83 = sphi 0, %s81
      %s84 = sphi 0, %s83
      %s98 = sphi 0, %s84
      %s102 = sphi 0, %s102
      %s104 = sphi 0, %s102
      %s105 = sphi 0, %s104
      %s119 = sphi 0, %s105
      %s123 = sphi 0, %s123
      %s125 = sphi 0, %s123
      %s126 = sphi 0, %s125
      %s140 = sphi 0, %s126
      %s144 = sphi 0, %s144
      %s146 = sphi 0, %s144
      %s147 = sphi 0, %s146
      %s161 = sphi 0, %s147
      %s165 = sphi 0, %s165
      %s167 = sphi 0, %s165
      %s168 = sphi 0, %s167
      %s182 = sphi 0, %s168
      %s186 = sphi 0, %s186
      %s188 = sphi 0, %s186
      %s189 = sphi 0, %s188
      %s203 = sphi 0, %s189
      %s209 = sphi 0, %s211
      %s212 = sphi 0, %s209
      %s213 = sphi 0, %s212
      %s229 = sphi 0, %s213
    $region4: #{tpu_custom_call.1} parent=1 // loop_header_branch
      %24 = sbr.rel (%p22) target = $region8
    $region5: #{tpu_custom_call.1} parent=1 // loop_body
      %s26 = ssub.s32 %s21, 1
      %s27 = ssub.s32 %s21, 2
      %s28 = sadd.s32 %s21, 1
      %s29 = ssub.s32 %s21, %s28
      %p30 = scmp.eq.s32.totalorder %s29, 0
      %s32 = sadd.s32 %s31, 1
      %s33 = scalar_select %p30, %s31, %s32
      %p36 = pneg %p30
      %p37 = scmp.eq.s32.totalorder %s21, 1
      %p38 = por %p36, %p37
      %p39 = scmp.ne.s32.totalorder %s31, %s34
      %p40 = scmp.eq.s32.totalorder %s21, 0
      %p41 = por %p39, %p40
      %p42 = scmp.ne.s32.totalorder %s31, %s34
      %p43 = scmp.eq.s32.totalorder %s26, 1
      %p44 = por %p42, %p43
      %p45 = scmp.ne.s32.totalorder %s34, %s35
      %p46 = scmp.eq.s32.totalorder %s26, 0
      %p47 = por %p45, %p46
      %p48 = scmp.ne.s32.totalorder %s34, %s35
      %p49 = scmp.eq.s32.totalorder %s27, 1
      %p50 = por %p48, %p49
      %p52 = scmp.ne.s32.totalorder %s35, %s51
      %p53 = scmp.eq.s32.totalorder %s27, 0
      %p54 = por %p52, %p53
      %s55 = ssub.s32 %s21, %s28
      %p56 = scmp.eq.s32.totalorder %s55, 0
      %s58 = sadd.s32 %s57, 1
      %s59 = scalar_select %p56, %s57, %s58
      %p62 = pneg %p56
      %p63 = scmp.eq.s32.totalorder %s21, 1
      %p64 = por %p62, %p63
      %p65 = scmp.ne.s32.totalorder %s57, %s60
      %p66 = scmp.eq.s32.totalorder %s21, 0
      %p67 = por %p65, %p66
      %p68 = scmp.ne.s32.totalorder %s57, %s60
      %p69 = scmp.eq.s32.totalorder %s26, 1
      %p70 = por %p68, %p69
      %p71 = scmp.ne.s32.totalorder %s60, %s61
      %p72 = scmp.eq.s32.totalorder %s26, 0
      %p73 = por %p71, %p72
      %p74 = scmp.ne.s32.totalorder %s60, %s61
      %p75 = scmp.eq.s32.totalorder %s27, 1
      %p76 = por %p74, %p75
      %p78 = scmp.ne.s32.totalorder %s61, %s77
      %p79 = scmp.eq.s32.totalorder %s27, 0
      %p80 = por %p78, %p79
      %s82 = sadd.s32 %s81, 1
      %p85 = scmp.eq.s32.totalorder %s21, 1
      %p86 = scmp.ne.s32.totalorder %s81, %s83
      %p87 = scmp.eq.s32.totalorder %s21, 0
      %p88 = por %p86, %p87
      %p89 = scmp.ne.s32.totalorder %s81, %s83
      %p90 = scmp.eq.s32.totalorder %s26, 1
      %p91 = por %p89, %p90
      %p92 = scmp.ne.s32.totalorder %s83, %s84
      %p93 = scmp.eq.s32.totalorder %s26, 0
      %p94 = por %p92, %p93
      %p95 = scmp.ne.s32.totalorder %s83, %s84
      %p96 = scmp.eq.s32.totalorder %s27, 1
      %p97 = por %p95, %p96
      %p99 = scmp.ne.s32.totalorder %s84, %s98
      %p100 = scmp.eq.s32.totalorder %s27, 0
      %p101 = por %p99, %p100
      %s103 = sadd.s32 %s102, 1
      %p106 = scmp.eq.s32.totalorder %s21, 1
      %p107 = scmp.ne.s32.totalorder %s102, %s104
      %p108 = scmp.eq.s32.totalorder %s21, 0
      %p109 = por %p107, %p108
      %p110 = scmp.ne.s32.totalorder %s102, %s104
      %p111 = scmp.eq.s32.totalorder %s26, 1
      %p112 = por %p110, %p111
      %p113 = scmp.ne.s32.totalorder %s104, %s105
      %p114 = scmp.eq.s32.totalorder %s26, 0
      %p115 = por %p113, %p114
      %p116 = scmp.ne.s32.totalorder %s104, %s105
      %p117 = scmp.eq.s32.totalorder %s27, 1
      %p118 = por %p116, %p117
      %p120 = scmp.ne.s32.totalorder %s105, %s119
      %p121 = scmp.eq.s32.totalorder %s27, 0
      %p122 = por %p120, %p121
      %s124 = sadd.s32 %s123, 1
      %p127 = scmp.eq.s32.totalorder %s21, 1
      %p128 = scmp.ne.s32.totalorder %s123, %s125
      %p129 = scmp.eq.s32.totalorder %s21, 0
      %p130 = por %p128, %p129
      %p131 = scmp.ne.s32.totalorder %s123, %s125
      %p132 = scmp.eq.s32.totalorder %s26, 1
      %p133 = por %p131, %p132
      %p134 = scmp.ne.s32.totalorder %s125, %s126
      %p135 = scmp.eq.s32.totalorder %s26, 0
      %p136 = por %p134, %p135
      %p137 = scmp.ne.s32.totalorder %s125, %s126
      %p138 = scmp.eq.s32.totalorder %s27, 1
      %p139 = por %p137, %p138
      %p141 = scmp.ne.s32.totalorder %s126, %s140
      %p142 = scmp.eq.s32.totalorder %s27, 0
      %p143 = por %p141, %p142
      %s145 = sadd.s32 %s144, 1
      %p148 = scmp.eq.s32.totalorder %s21, 1
      %p149 = scmp.ne.s32.totalorder %s144, %s146
      %p150 = scmp.eq.s32.totalorder %s21, 0
      %p151 = por %p149, %p150
      %p152 = scmp.ne.s32.totalorder %s144, %s146
      %p153 = scmp.eq.s32.totalorder %s26, 1
      %p154 = por %p152, %p153
      %p155 = scmp.ne.s32.totalorder %s146, %s147
      %p156 = scmp.eq.s32.totalorder %s26, 0
      %p157 = por %p155, %p156
      %p158 = scmp.ne.s32.totalorder %s146, %s147
      %p159 = scmp.eq.s32.totalorder %s27, 1
      %p160 = por %p158, %p159
      %p162 = scmp.ne.s32.totalorder %s147, %s161
      %p163 = scmp.eq.s32.totalorder %s27, 0
      %p164 = por %p162, %p163
      %s166 = sadd.s32 %s165, 1
      %p169 = scmp.eq.s32.totalorder %s21, 1
      %p170 = scmp.ne.s32.totalorder %s165, %s167
      %p171 = scmp.eq.s32.totalorder %s21, 0
      %p172 = por %p170, %p171
      %p173 = scmp.ne.s32.totalorder %s165, %s167
      %p174 = scmp.eq.s32.totalorder %s26, 1
      %p175 = por %p173, %p174
      %p176 = scmp.ne.s32.totalorder %s167, %s168
      %p177 = scmp.eq.s32.totalorder %s26, 0
      %p178 = por %p176, %p177
      %p179 = scmp.ne.s32.totalorder %s167, %s168
      %p180 = scmp.eq.s32.totalorder %s27, 1
      %p181 = por %p179, %p180
      %p183 = scmp.ne.s32.totalorder %s168, %s182
      %p184 = scmp.eq.s32.totalorder %s27, 0
      %p185 = por %p183, %p184
      %s187 = sadd.s32 %s186, 1
      %p190 = scmp.eq.s32.totalorder %s21, 1
      %p191 = scmp.ne.s32.totalorder %s186, %s188
      %p192 = scmp.eq.s32.totalorder %s21, 0
      %p193 = por %p191, %p192
      %p194 = scmp.ne.s32.totalorder %s186, %s188
      %p195 = scmp.eq.s32.totalorder %s26, 1
      %p196 = por %p194, %p195
      %p197 = scmp.ne.s32.totalorder %s188, %s189
      %p198 = scmp.eq.s32.totalorder %s26, 0
      %p199 = por %p197, %p198
      %p200 = scmp.ne.s32.totalorder %s188, %s189
      %p201 = scmp.eq.s32.totalorder %s27, 1
      %p202 = por %p200, %p201
      %p204 = scmp.ne.s32.totalorder %s189, %s203
      %p205 = scmp.eq.s32.totalorder %s27, 0
      %p206 = por %p204, %p205
      %s207 = ssub.s32 %s21, %s28
      %p208 = scmp.eq.s32.totalorder %s207, 0
      %s210 = sadd.s32 %s209, 1
      %s211 = scalar_select %p208, %s209, %s210
      %p214 = pneg %p208
      %p215 = scmp.eq.s32.totalorder %s21, 1
      %p216 = por %p214, %p215
      %p217 = scmp.ne.s32.totalorder %s209, %s212
      %p218 = scmp.eq.s32.totalorder %s21, 0
      %p219 = por %p217, %p218
      %p220 = scmp.ne.s32.totalorder %s209, %s212
      %p221 = scmp.eq.s32.totalorder %s26, 1
      %p222 = por %p220, %p221
      %p223 = scmp.ne.s32.totalorder %s212, %s213
      %p224 = scmp.eq.s32.totalorder %s26, 0
      %p225 = por %p223, %p224
      %p226 = scmp.ne.s32.totalorder %s212, %s213
      %p227 = scmp.eq.s32.totalorder %s27, 1
      %p228 = por %p226, %p227
      %p230 = scmp.ne.s32.totalorder %s213, %s229
      %p231 = scmp.eq.s32.totalorder %s27, 0
      %p232 = por %p230, %p231
      %p233 = scmp.le.s32.totalorder 1, %s21
      %p234 = scmp.lt.s32.totalorder %s21, 3
      %p235 = pnand %p233, %p234
      %p236 = pneg %p235
      // Predicated region
      $region9: #{tpu_custom_call.1} parent=5 // pred_check
        _
      $region10: #{tpu_custom_call.1} parent=5 // pred_check_branch
        %238 = sbr.rel (%p235) target = $region12
      $region11: #{tpu_custom_call.1} parent=5 // pred_region
        %s239 = ssub.s32 %s21, 1
        // Predicated region
        $region13: #{tpu_custom_call.1} parent=11 // pred_check
          %p240 = pneg %p94
        $region14: #{tpu_custom_call.1} parent=11 // pred_check_branch
          %242 = sbr.rel (%p240) target = $region16
        $region15: #{tpu_custom_call.1} parent=11 // pred_region
          %s244 = ssub.s32 256, 256
          %245 = vsyncadd [#allocation7], %s244
          %s246 = sshll.u32 [#allocation6], 4
          %s247 = int_to_ptr.vmem [resolvable:$true] %s246
          %252 = dma.hbm_to_vmem [thread:$0]  %s2, 256, %s247, [#allocation7], 64, 64, 4
        $region16: #{tpu_custom_call.1} parent=11 // pred_fallthru
          _
        // Predicated region
        $region17: #{tpu_custom_call.1} parent=11 // pred_check
          %p253 = pneg %p115
        $region18: #{tpu_custom_call.1} parent=11 // pred_check_branch
          %255 = sbr.rel (%p253) target = $region20
        $region19: #{tpu_custom_call.1} parent=11 // pred_region
          _
        $region20: #{tpu_custom_call.1} parent=11 // pred_fallthru
          _
        // Predicated region
        $region21: #{tpu_custom_call.1} parent=11 // pred_check
          %p256 = pneg %p136
        $region22: #{tpu_custom_call.1} parent=11 // pred_check_branch
          %258 = sbr.rel (%p256) target = $region24
        $region23: #{tpu_custom_call.1} parent=11 // pred_region
          %s260 = ssub.s32 256, 256
          %261 = vsyncadd [#allocation7], %s260
          %s262 = sshll.u32 [#allocation8], 4
          %s263 = int_to_ptr.vmem [resolvable:$true] %s262
          %268 = dma.hbm_to_vmem [thread:$0]  %s4, 256, %s263, [#allocation7], 64, 64, 4
        $region24: #{tpu_custom_call.1} parent=11 // pred_fallthru
          _
        // Predicated region
        $region25: #{tpu_custom_call.1} parent=11 // pred_check
          %p269 = pneg %p157
        $region26: #{tpu_custom_call.1} parent=11 // pred_check_branch
          %271 = sbr.rel (%p269) target = $region28
        $region27: #{tpu_custom_call.1} parent=11 // pred_region
          _
        $region28: #{tpu_custom_call.1} parent=11 // pred_fallthru
          _
        // Predicated region
        $region29: #{tpu_custom_call.1} parent=11 // pred_check
          %p272 = pneg %p178
        $region30: #{tpu_custom_call.1} parent=11 // pred_check_branch
          %274 = sbr.rel (%p272) target = $region32
        $region31: #{tpu_custom_call.1} parent=11 // pred_region
          _
        $region32: #{tpu_custom_call.1} parent=11 // pred_fallthru
          _
        // Predicated region
        $region33: #{tpu_custom_call.1} parent=11 // pred_check
          %p275 = pneg %p199
        $region34: #{tpu_custom_call.1} parent=11 // pred_check_branch
          %277 = sbr.rel (%p275) target = $region36
        $region35: #{tpu_custom_call.1} parent=11 // pred_region
          _
        $region36: #{tpu_custom_call.1} parent=11 // pred_fallthru
          _
      $region12: #{tpu_custom_call.1} parent=5 // pred_fallthru
        _
      %p278 = scmp.lt.s32.totalorder %s21, 2
      // Predicated region
      $region37: #{tpu_custom_call.1} parent=5 // pred_check
        %p279 = pneg %p278
      $region38: #{tpu_custom_call.1} parent=5 // pred_check_branch
        %281 = sbr.rel (%p279) target = $region40
      $region39: #{tpu_custom_call.1} parent=5 // pred_region
        // Predicated region
        $region41: #{tpu_custom_call.1} parent=39 // pred_check
          %p282 = pneg %p41
        $region42: #{tpu_custom_call.1} parent=39 // pred_check_branch
          %284 = sbr.rel (%p282) target = $region44
        $region43: #{tpu_custom_call.1} parent=39 // pred_region
          %s285 = sand.u32 %s31, 1
          %s286 = scalar_lea.sflag [#allocation4], %s285
          %s287 = sand.u32 %s31, 1
          %s288 = smul.addr %s287, 8
          %s289 = scalar_lea.vmem [#allocation3], %s288
          %s291 = ssub.s32 128, 128
          %292 = vsyncadd %s286, %s291
          %s293 = smul.addr %s21, 128
          %s294 = scalar_lea.hbm %s0, %s293
          %s296 = sshll.u32 %s289, 4
          %s297 = int_to_ptr.vmem [resolvable:$true] %s296
          %299 = dma.hbm_to_vmem [thread:$0]  %s294, 128, %s297, %s286
        $region44: #{tpu_custom_call.1} parent=39 // pred_fallthru
          _
        // Predicated region
        $region45: #{tpu_custom_call.1} parent=39 // pred_check
          %p300 = pneg %p67
        $region46: #{tpu_custom_call.1} parent=39 // pred_check_branch
          %302 = sbr.rel (%p300) target = $region48
        $region47: #{tpu_custom_call.1} parent=39 // pred_region
          %p303 = scmp.lt.s32.totalorder %s21, 1
          %s304 = scalar_select %p303, %s21, 1
          %s305 = scalar_lea.vmem %s1, %s304
        $region48: #{tpu_custom_call.1} parent=39 // pred_fallthru
          _
      $region40: #{tpu_custom_call.1} parent=5 // pred_fallthru
        _
      %p306 = scmp.le.s32.totalorder 1, %s21
      %p307 = scmp.lt.s32.totalorder %s21, 3
      %p308 = pnand %p306, %p307
      %p309 = pneg %p308
      // Predicated region
      $region49: #{tpu_custom_call.1} parent=5 // pred_check
        _
      $region50: #{tpu_custom_call.1} parent=5 // pred_check_branch
        %311 = sbr.rel (%p308) target = $region52
      $region51: #{tpu_custom_call.1} parent=5 // pred_region
        %s312 = ssub.s32 %s21, 1
        %s313 = sand.u32 %s34, 1
        %s314 = scalar_lea.sflag [#allocation4], %s313
        %s315 = sand.u32 %s34, 1
        %s316 = smul.addr %s315, 8
        %s317 = scalar_lea.vmem [#allocation3], %s316
        // Predicated region
        $region53: #{tpu_custom_call.1} parent=51 // pred_check
          %p318 = pneg %p47
        $region54: #{tpu_custom_call.1} parent=51 // pred_check_branch
          %320 = sbr.rel (%p318) target = $region56
        $region55: #{tpu_custom_call.1} parent=51 // pred_region
          %321 = dma.done %s314, 128
        $region56: #{tpu_custom_call.1} parent=51 // pred_fallthru
          _
        // Predicated region
        $region57: #{tpu_custom_call.1} parent=51 // pred_check
          %p322 = pneg %p94
        $region58: #{tpu_custom_call.1} parent=51 // pred_check_branch
          %324 = sbr.rel (%p322) target = $region60
        $region59: #{tpu_custom_call.1} parent=51 // pred_region
          %325 = dma.done [#allocation7], 256
        $region60: #{tpu_custom_call.1} parent=51 // pred_fallthru
          _
        // Predicated region
        $region61: #{tpu_custom_call.1} parent=51 // pred_check
          %p326 = pneg %p136
        $region62: #{tpu_custom_call.1} parent=51 // pred_check_branch
          %328 = sbr.rel (%p326) target = $region64
        $region63: #{tpu_custom_call.1} parent=51 // pred_region
          %329 = dma.done [#allocation7], 256
        $region64: #{tpu_custom_call.1} parent=51 // pred_fallthru
          _
        %s330 = sand.u32 %s34, 1
        %s331 = scalar_lea.sflag [#allocation4], %s330
        %s332 = sand.u32 %s34, 1
        %s333 = smul.addr %s332, 8
        %s334 = scalar_lea.vmem [#allocation3], %s333
        %p335 = pneg %p47
        %p336 = pneg %p44
        %p337 = scmp.lt.s32.totalorder %s26, 1
        %s338 = scalar_select %p337, %s26, 1
        %s339 = scalar_lea.vmem %s1, %s338
        %p340 = pneg %p73
        %p341 = pneg %p70
        %p342 = pneg %p94
        %p343 = pneg %p91
        %p344 = pneg %p115
        %p345 = pneg %p112
        %p346 = pneg %p136
        %p347 = pneg %p133
        %p348 = pneg %p157
        %p349 = pneg %p154
        %p350 = pneg %p178
        %p351 = pneg %p175
        %p352 = pneg %p199
        %p353 = pneg %p196
        %p354 = pneg %p225
        %p355 = pneg %p222
        %s356 = sand.u32 %s212, 1
        %s357 = scalar_lea.sflag [#allocation5], %s356
        %s358 = sand.u32 %s212, 1
        %s359 = smul.addr %s358, 8
        %s360 = scalar_lea.vmem [#allocation9], %s359
        %p361 = scmp.lt.s32.totalorder %s26, 1
        %s362 = scalar_select %p361, %s26, 1
        %s363 = scalar_lea.vmem %s1, %s362
        %v365 = vld [vmem:[%s317] sm:$0xff]
        %v366 = vpack.c.bf16 %v365, %v365
        %v367 = vld [vmem:[#allocation6] sm:$0xf]
        %v368 = vld [vmem:[#allocation6 + $0x4] sm:$0xf]
        %v369 = vld [vmem:[#allocation6 + $0x8] sm:$0xf]
        %v370 = vld [vmem:[#allocation6 + $0xc] sm:$0xf]
        %v371 = vld [vmem:[%s3] sm:$0x1]
        %v373 = vlaneseq
        %v374 = vshrl.u32 %v373, 7
        %v375 = vsub.s32 0, %v374
        %v376 = vrot.slane %v371, %v375
        %v382 = vunpack.c.l.b16 %v367
        %v383 = vunpack.c.l.b16 %v368
        %v384 = vunpack.c.l.b16 %v369
        %v385 = vunpack.c.l.b16 %v370
        %v386 = vpack.c.b16 %v383, %v382
        %v387 = vpack.c.b16 %v385, %v384
        %vm390 = vcmask 261120
        %v392 = vsel %vm390, %v366, 0
        %394 = vmatprep.subr.bf16.mxu0 0
        %395 = vmatpush1.bf16.msra.mxu0 %v386
        %396 = vmatprep.subr.bf16.mxu0 0
        %397 = vmatpush1.bf16.msra.mxu0 %v387
        %398 = vmatprep.subr.bf16.mxu0 0
        %399 = vmatpush1.bf16.msra.mxu0 0
        %400 = vmatprep.subr.bf16.mxu0 0
        %401 = vmatpush1.bf16.msra.mxu0 0
        %402 = vmatprep.subr.bf16.mxu0 0
        %403 = vmatpush1.bf16.msra.mxu0 0
        %404 = vmatprep.subr.bf16.mxu0 0
        %405 = vmatpush1.bf16.msra.mxu0 0
        %406 = vmatprep.subr.bf16.mxu0 0
        %407 = vmatpush1.bf16.msra.mxu0 0
        %408 = vmatprep.subr.bf16.mxu0 0
        %409 = vmatpush1.bf16.msra.mxu0 0
        %410 = vmatprep.subr.bf16.mxu0 0
        %411 = vmatpush1.bf16.msra.mxu0 0
        %412 = vmatprep.subr.bf16.mxu0 0
        %413 = vmatpush1.bf16.msra.mxu0 0
        %414 = vmatprep.subr.bf16.mxu0 0
        %415 = vmatpush1.bf16.msra.mxu0 0
        %416 = vmatprep.subr.bf16.mxu0 0
        %417 = vmatpush1.bf16.msra.mxu0 0
        %418 = vmatprep.subr.bf16.mxu0 0
        %419 = vmatpush1.bf16.msra.mxu0 0
        %420 = vmatprep.subr.bf16.mxu0 0
        %421 = vmatpush1.bf16.msra.mxu0 0
        %422 = vmatprep.subr.bf16.mxu0 0
        %423 = vmatpush1.bf16.msra.mxu0 0
        %424 = vmatprep.subr.bf16.mxu0 0
        %425 = vmatpush1.bf16.msra.mxu0 0
        %426 = vmatprep.mubr.bf16.mxu0 0
        %427 = vmatmul.mubr.bf16.gmra.mrb[0].mxu0 %v392
        %v428 = vpop.f32.mrb[0].mxu0
        %v429 = vadd.f32 %v376, %v428
        %v430 = vpop.f32.mrb[0].mxu0
        %v431 = vpop.f32.mrb[0].mxu0
        %v432 = vpop.f32.mrb[0].mxu0
        %433 = vdwg.mxu0
        %v434 = vpack.c.bf16 %v429, %v429
        %v435 = vld [vmem:[%s363] sm:$0x1]
        %v437 = vlaneseq
        %v438 = vshrl.u32 %v437, 7
        %v439 = vsub.s32 0, %v438
        %v440 = vrot.slane %v435, %v439
        %443 = vrot.lane.b32.xlu0 %v434, 96
        %v444 = vpop.permute.xlu0 %443
        %vm445 = vcmask 64512
        %v447 = vsel %vm445, %v434, 0
        %v450 = vsel %vm445, %v444, 0
        %452 = vmatprep.subr.bf16.mxu0 0
        %453 = vmatpush1.bf16.xpose.msra.mxu0 %v450
        %454 = vmatprep.subr.bf16.mxu0 0
        %455 = vmatpush1.bf16.xpose.msra.mxu0 0
        %456 = vmatprep.subr.bf16.mxu0 0
        %457 = vmatpush1.bf16.xpose.msra.mxu0 0
        %458 = vmatprep.subr.bf16.mxu0 0
        %459 = vmatpush1.bf16.xpose.msra.mxu0 0
        %460 = vmatprep.subr.bf16.mxu0 0
        %461 = vmatpush1.bf16.xpose.msra.mxu0 0
        %462 = vmatprep.subr.bf16.mxu0 0
        %463 = vmatpush1.bf16.xpose.msra.mxu0 0
        %464 = vmatprep.subr.bf16.mxu0 0
        %465 = vmatpush1.bf16.xpose.msra.mxu0 0
        %466 = vmatprep.subr.bf16.mxu0 0
        %467 = vmatpush1.bf16.xpose.msra.mxu0 0
        %468 = vmatprep.subr.bf16.mxu0 0
        %469 = vmatpush1.bf16.xpose.msra.mxu0 0
        %470 = vmatprep.subr.bf16.mxu0 0
        %471 = vmatpush1.bf16.xpose.msra.mxu0 0
        %472 = vmatprep.subr.bf16.mxu0 0
        %473 = vmatpush1.bf16.xpose.msra.mxu0 0
        %474 = vmatprep.subr.bf16.mxu0 0
        %475 = vmatpush1.bf16.xpose.msra.mxu0 0
        %476 = vmatprep.subr.bf16.mxu0 0
        %477 = vmatpush1.bf16.xpose.msra.mxu0 0
        %478 = vmatprep.subr.bf16.mxu0 0
        %479 = vmatpush1.bf16.xpose.msra.mxu0 0
        %480 = vmatprep.subr.bf16.mxu0 0
        %481 = vmatpush1.bf16.xpose.msra.mxu0 0
        %482 = vmatprep.subr.bf16.mxu0 0
        %483 = vmatpush1.bf16.xpose.msra.mxu0 0
        %484 = vmatprep.mubr.bf16.mxu0 0
        %485 = vmatmul.mubr.bf16.gmra.mrb[0].mxu0 %v447
        %v486 = vpop.f32.mrb[0].mxu0
        %v487 = vadd.f32 %v440, %v486
        %v488 = vpop.f32.mrb[0].mxu0
        %v489 = vpop.f32.mrb[0].mxu0
        %v490 = vpop.f32.mrb[0].mxu0
        %491 = vdwg.mxu0
        %v492 = vsel %vm445, %v487, -inf
        %493 = vmax.xlane.f32.xlu0 %v492
        %v494 = vpop.xlane.xlu0 %493
        %v495 = vsub.f32 %v487, %v494
        %v496 = vmul.f32 %v495, 1.442695
        %v497 = vpow.pop %v496
        %v498 = vsel %vm445, %v497, 0.0
        %499 = vadd.xlane.f32.xlu0 %v498
        %v500 = vpop.xlane.xlu0 %499
        %v501 = vpack.c.bf16 %v497, %v497
        %502 = vrot.lane.b32.xlu0 %v434, 64
        %v503 = vpop.permute.xlu0 %502
        %v505 = vsel %vm445, %v501, 0
        %vm507 = vcmask 1043456
        %v509 = vsel %vm507, %v503, 0
        %511 = vmatprep.subr.bf16.mxu0 0
        %512 = vmatpush1.bf16.msra.mxu0 %v509
        %513 = vmatprep.subr.bf16.mxu0 0
        %514 = vmatpush1.bf16.msra.mxu0 0
        %515 = vmatprep.subr.bf16.mxu0 0
        %516 = vmatpush1.bf16.msra.mxu0 0
        %517 = vmatprep.subr.bf16.mxu0 0
        %518 = vmatpush1.bf16.msra.mxu0 0
        %519 = vmatprep.subr.bf16.mxu0 0
        %520 = vmatpush1.bf16.msra.mxu0 0
        %521 = vmatprep.subr.bf16.mxu0 0
        %522 = vmatpush1.bf16.msra.mxu0 0
        %523 = vmatprep.subr.bf16.mxu0 0
        %524 = vmatpush1.bf16.msra.mxu0 0
        %525 = vmatprep.subr.bf16.mxu0 0
        %526 = vmatpush1.bf16.msra.mxu0 0
        %527 = vmatprep.subr.bf16.mxu0 0
        %528 = vmatpush1.bf16.msra.mxu0 0
        %529 = vmatprep.subr.bf16.mxu0 0
        %530 = vmatpush1.bf16.msra.mxu0 0
        %531 = vmatprep.subr.bf16.mxu0 0
        %532 = vmatpush1.bf16.msra.mxu0 0
        %533 = vmatprep.subr.bf16.mxu0 0
        %534 = vmatpush1.bf16.msra.mxu0 0
        %535 = vmatprep.subr.bf16.mxu0 0
        %536 = vmatpush1.bf16.msra.mxu0 0
        %537 = vmatprep.subr.bf16.mxu0 0
        %538 = vmatpush1.bf16.msra.mxu0 0
        %539 = vmatprep.subr.bf16.mxu0 0
        %540 = vmatpush1.bf16.msra.mxu0 0
        %541 = vmatprep.subr.bf16.mxu0 0
        %542 = vmatpush1.bf16.msra.mxu0 0
        %543 = vmatprep.mubr.bf16.mxu0 0
        %544 = vmatmul.mubr.bf16.gmra.mrb[0].mxu0 %v505
        %v545 = vpop.f32.mrb[0].mxu0
        %v546 = vadd.f32 0.0, %v545
        %v547 = vpop.f32.mrb[0].mxu0
        %v548 = vpop.f32.mrb[0].mxu0
        %v549 = vpop.f32.mrb[0].mxu0
        %550 = vdwg.mxu0
        %v551 = vrcp.pop %v500
        %v552 = vmul.f32 %v546, %v551
        %553 = vst.msk [vmem:[#allocation2] sm:$0xff] %vm445, %v552
        %554 = vrot.lane.b32.xlu0 %v434, 120
        %v555 = vpop.permute.xlu0 %554
        %556 = vrot.lane.b32.xlu0 %v434, 88
        %v557 = vpop.permute.xlu0 %556
        %v559 = vsel %vm445, %v555, 0
        %v562 = vsel %vm445, %v557, 0
        %564 = vmatprep.subr.bf16.mxu0 0
        %565 = vmatpush1.bf16.xpose.msra.mxu0 %v562
        %566 = vmatprep.subr.bf16.mxu0 0
        %567 = vmatpush1.bf16.xpose.msra.mxu0 0
        %568 = vmatprep.subr.bf16.mxu0 0
        %569 = vmatpush1.bf16.xpose.msra.mxu0 0
        %570 = vmatprep.subr.bf16.mxu0 0
        %571 = vmatpush1.bf16.xpose.msra.mxu0 0
        %572 = vmatprep.subr.bf16.mxu0 0
        %573 = vmatpush1.bf16.xpose.msra.mxu0 0
        %574 = vmatprep.subr.bf16.mxu0 0
        %575 = vmatpush1.bf16.xpose.msra.mxu0 0
        %576 = vmatprep.subr.bf16.mxu0 0
        %577 = vmatpush1.bf16.xpose.msra.mxu0 0
        %578 = vmatprep.subr.bf16.mxu0 0
        %579 = vmatpush1.bf16.xpose.msra.mxu0 0
        %580 = vmatprep.subr.bf16.mxu0 0
        %581 = vmatpush1.bf16.xpose.msra.mxu0 0
        %582 = vmatprep.subr.bf16.mxu0 0
        %583 = vmatpush1.bf16.xpose.msra.mxu0 0
        %584 = vmatprep.subr.bf16.mxu0 0
        %585 = vmatpush1.bf16.xpose.msra.mxu0 0
        %586 = vmatprep.subr.bf16.mxu0 0
        %587 = vmatpush1.bf16.xpose.msra.mxu0 0
        %588 = vmatprep.subr.bf16.mxu0 0
        %589 = vmatpush1.bf16.xpose.msra.mxu0 0
        %590 = vmatprep.subr.bf16.mxu0 0
        %591 = vmatpush1.bf16.xpose.msra.mxu0 0
        %592 = vmatprep.subr.bf16.mxu0 0
        %593 = vmatpush1.bf16.xpose.msra.mxu0 0
        %594 = vmatprep.subr.bf16.mxu0 0
        %595 = vmatpush1.bf16.xpose.msra.mxu0 0
        %596 = vmatprep.mubr.bf16.mxu0 0
        %597 = vmatmul.mubr.bf16.gmra.mrb[0].mxu0 %v559
        %v598 = vpop.f32.mrb[0].mxu0
        %v599 = vadd.f32 %v440, %v598
        %v600 = vpop.f32.mrb[0].mxu0
        %v601 = vpop.f32.mrb[0].mxu0
        %v602 = vpop.f32.mrb[0].mxu0
        %603 = vdwg.mxu0
        %v604 = vsel %vm445, %v599, -inf
        %605 = vmax.xlane.f32.xlu0 %v604
        %v606 = vpop.xlane.xlu0 %605
        %v607 = vsub.f32 %v599, %v606
        %v608 = vmul.f32 %v607, 1.442695
        %v609 = vpow.pop %v608
        %v610 = vsel %vm445, %v609, 0.0
        %611 = vadd.xlane.f32.xlu0 %v610
        %v612 = vpop.xlane.xlu0 %611
        %v613 = vpack.c.bf16 %v609, %v609
        %614 = vrot.lane.b32.xlu0 %v434, 56
        %v615 = vpop.permute.xlu0 %614
        %v617 = vsel %vm445, %v613, 0
        %v620 = vsel %vm507, %v615, 0
        %622 = vmatprep.subr.bf16.mxu0 0
        %623 = vmatpush1.bf16.msra.mxu0 %v620
        %624 = vmatprep.subr.bf16.mxu0 0
        %625 = vmatpush1.bf16.msra.mxu0 0
        %626 = vmatprep.subr.bf16.mxu0 0
        %627 = vmatpush1.bf16.msra.mxu0 0
        %628 = vmatprep.subr.bf16.mxu0 0
        %629 = vmatpush1.bf16.msra.mxu0 0
        %630 = vmatprep.subr.bf16.mxu0 0
        %631 = vmatpush1.bf16.msra.mxu0 0
        %632 = vmatprep.subr.bf16.mxu0 0
        %633 = vmatpush1.bf16.msra.mxu0 0
        %634 = vmatprep.subr.bf16.mxu0 0
        %635 = vmatpush1.bf16.msra.mxu0 0
        %636 = vmatprep.subr.bf16.mxu0 0
        %637 = vmatpush1.bf16.msra.mxu0 0
        %638 = vmatprep.subr.bf16.mxu0 0
        %639 = vmatpush1.bf16.msra.mxu0 0
        %640 = vmatprep.subr.bf16.mxu0 0
        %641 = vmatpush1.bf16.msra.mxu0 0
        %642 = vmatprep.subr.bf16.mxu0 0
        %643 = vmatpush1.bf16.msra.mxu0 0
        %644 = vmatprep.subr.bf16.mxu0 0
        %645 = vmatpush1.bf16.msra.mxu0 0
        %646 = vmatprep.subr.bf16.mxu0 0
        %647 = vmatpush1.bf16.msra.mxu0 0
        %648 = vmatprep.subr.bf16.mxu0 0
        %649 = vmatpush1.bf16.msra.mxu0 0
        %650 = vmatprep.subr.bf16.mxu0 0
        %651 = vmatpush1.bf16.msra.mxu0 0
        %652 = vmatprep.subr.bf16.mxu0 0
        %653 = vmatpush1.bf16.msra.mxu0 0
        %654 = vmatprep.mubr.bf16.mxu0 0
        %655 = vmatmul.mubr.bf16.gmra.mrb[0].mxu0 %v617
        %v656 = vpop.f32.mrb[0].mxu0
        %v657 = vadd.f32 0.0, %v656
        %v658 = vpop.f32.mrb[0].mxu0
        %v659 = vpop.f32.mrb[0].mxu0
        %v660 = vpop.f32.mrb[0].mxu0
        %661 = vdwg.mxu0
        %v662 = vrcp.pop %v612
        %v663 = vmul.f32 %v657, %v662
        %665 = vrot.lane.b32.xlu0 %v663, 8
        %v666 = vpop.permute.xlu0 %665
        %vm668 = vcmask 130112
        %669 = vst.msk [vmem:[#allocation2] sm:$0xff] %vm668, %v666
        %670 = vrot.lane.b32.xlu0 %v434, 112
        %v671 = vpop.permute.xlu0 %670
        %672 = vrot.lane.b32.xlu0 %v434, 80
        %v673 = vpop.permute.xlu0 %672
        %v675 = vsel %vm445, %v671, 0
        %v678 = vsel %vm445, %v673, 0
        %680 = vmatprep.subr.bf16.mxu0 0
        %681 = vmatpush1.bf16.xpose.msra.mxu0 %v678
        %682 = vmatprep.subr.bf16.mxu0 0
        %683 = vmatpush1.bf16.xpose.msra.mxu0 0
        %684 = vmatprep.subr.bf16.mxu0 0
        %685 = vmatpush1.bf16.xpose.msra.mxu0 0
        %686 = vmatprep.subr.bf16.mxu0 0
        %687 = vmatpush1.bf16.xpose.msra.mxu0 0
        %688 = vmatprep.subr.bf16.mxu0 0
        %689 = vmatpush1.bf16.xpose.msra.mxu0 0
        %690 = vmatprep.subr.bf16.mxu0 0
        %691 = vmatpush1.bf16.xpose.msra.mxu0 0
        %692 = vmatprep.subr.bf16.mxu0 0
        %693 = vmatpush1.bf16.xpose.msra.mxu0 0
        %694 = vmatprep.subr.bf16.mxu0 0
        %695 = vmatpush1.bf16.xpose.msra.mxu0 0
        %696 = vmatprep.subr.bf16.mxu0 0
        %697 = vmatpush1.bf16.xpose.msra.mxu0 0
        %698 = vmatprep.subr.bf16.mxu0 0
        %699 = vmatpush1.bf16.xpose.msra.mxu0 0
        %700 = vmatprep.subr.bf16.mxu0 0
        %701 = vmatpush1.bf16.xpose.msra.mxu0 0
        %702 = vmatprep.subr.bf16.mxu0 0
        %703 = vmatpush1.bf16.xpose.msra.mxu0 0
        %704 = vmatprep.subr.bf16.mxu0 0
        %705 = vmatpush1.bf16.xpose.msra.mxu0 0
        %706 = vmatprep.subr.bf16.mxu0 0
        %707 = vmatpush1.bf16.xpose.msra.mxu0 0
        %708 = vmatprep.subr.bf16.mxu0 0
        %709 = vmatpush1.bf16.xpose.msra.mxu0 0
        %710 = vmatprep.subr.bf16.mxu0 0
        %711 = vmatpush1.bf16.xpose.msra.mxu0 0
        %712 = vmatprep.mubr.bf16.mxu0 0
        %713 = vmatmul.mubr.bf16.gmra.mrb[0].mxu0 %v675
        %v714 = vpop.f32.mrb[0].mxu0
        %v715 = vadd.f32 %v440, %v714
        %v716 = vpop.f32.mrb[0].mxu0
        %v717 = vpop.f32.mrb[0].mxu0
        %v718 = vpop.f32.mrb[0].mxu0
        %719 = vdwg.mxu0
        %v720 = vsel %vm445, %v715, -inf
        %721 = vmax.xlane.f32.xlu0 %v720
        %v722 = vpop.xlane.xlu0 %721
        %v723 = vsub.f32 %v715, %v722
        %v724 = vmul.f32 %v723, 1.442695
        %v725 = vpow.pop %v724
        %v726 = vsel %vm445, %v725, 0.0
        %727 = vadd.xlane.f32.xlu0 %v726
        %v728 = vpop.xlane.xlu0 %727
        %v729 = vpack.c.bf16 %v725, %v725
        %730 = vrot.lane.b32.xlu0 %v434, 48
        %v731 = vpop.permute.xlu0 %730
        %v733 = vsel %vm445, %v729, 0
        %v736 = vsel %vm507, %v731, 0
        %738 = vmatprep.subr.bf16.mxu0 0
        %739 = vmatpush1.bf16.msra.mxu0 %v736
        %740 = vmatprep.subr.bf16.mxu0 0
        %741 = vmatpush1.bf16.msra.mxu0 0
        %742 = vmatprep.subr.bf16.mxu0 0
        %743 = vmatpush1.bf16.msra.mxu0 0
        %744 = vmatprep.subr.bf16.mxu0 0
        %745 = vmatpush1.bf16.msra.mxu0 0
        %746 = vmatprep.subr.bf16.mxu0 0
        %747 = vmatpush1.bf16.msra.mxu0 0
        %748 = vmatprep.subr.bf16.mxu0 0
        %749 = vmatpush1.bf16.msra.mxu0 0
        %750 = vmatprep.subr.bf16.mxu0 0
        %751 = vmatpush1.bf16.msra.mxu0 0
        %752 = vmatprep.subr.bf16.mxu0 0
        %753 = vmatpush1.bf16.msra.mxu0 0
        %754 = vmatprep.subr.bf16.mxu0 0
        %755 = vmatpush1.bf16.msra.mxu0 0
        %756 = vmatprep.subr.bf16.mxu0 0
        %757 = vmatpush1.bf16.msra.mxu0 0
        %758 = vmatprep.subr.bf16.mxu0 0
        %759 = vmatpush1.bf16.msra.mxu0 0
        %760 = vmatprep.subr.bf16.mxu0 0
        %761 = vmatpush1.bf16.msra.mxu0 0
        %762 = vmatprep.subr.bf16.mxu0 0
        %763 = vmatpush1.bf16.msra.mxu0 0
        %764 = vmatprep.subr.bf16.mxu0 0
        %765 = vmatpush1.bf16.msra.mxu0 0
        %766 = vmatprep.subr.bf16.mxu0 0
        %767 = vmatpush1.bf16.msra.mxu0 0
        %768 = vmatprep.subr.bf16.mxu0 0
        %769 = vmatpush1.bf16.msra.mxu0 0
        %770 = vmatprep.mubr.bf16.mxu0 0
        %771 = vmatmul.mubr.bf16.gmra.mrb[0].mxu0 %v733
        %v772 = vpop.f32.mrb[0].mxu0
        %v773 = vadd.f32 0.0, %v772
        %v774 = vpop.f32.mrb[0].mxu0
        %v775 = vpop.f32.mrb[0].mxu0
        %v776 = vpop.f32.mrb[0].mxu0
        %777 = vdwg.mxu0
        %v778 = vrcp.pop %v728
        %v779 = vmul.f32 %v773, %v778
        %781 = vrot.lane.b32.xlu0 %v779, 16
        %v782 = vpop.permute.xlu0 %781
        %vm784 = vcmask 195712
        %785 = vst.msk [vmem:[#allocation2] sm:$0xff] %vm784, %v782
        %786 = vrot.lane.b32.xlu0 %v434, 104
        %v787 = vpop.permute.xlu0 %786
        %788 = vrot.lane.b32.xlu0 %v434, 72
        %v789 = vpop.permute.xlu0 %788
        %v791 = vsel %vm445, %v787, 0
        %v794 = vsel %vm445, %v789, 0
        %796 = vmatprep.subr.bf16.mxu0 0
        %797 = vmatpush1.bf16.xpose.msra.mxu0 %v794
        %798 = vmatprep.subr.bf16.mxu0 0
        %799 = vmatpush1.bf16.xpose.msra.mxu0 0
        %800 = vmatprep.subr.bf16.mxu0 0
        %801 = vmatpush1.bf16.xpose.msra.mxu0 0
        %802 = vmatprep.subr.bf16.mxu0 0
        %803 = vmatpush1.bf16.xpose.msra.mxu0 0
        %804 = vmatprep.subr.bf16.mxu0 0
        %805 = vmatpush1.bf16.xpose.msra.mxu0 0
        %806 = vmatprep.subr.bf16.mxu0 0
        %807 = vmatpush1.bf16.xpose.msra.mxu0 0
        %808 = vmatprep.subr.bf16.mxu0 0
        %809 = vmatpush1.bf16.xpose.msra.mxu0 0
        %810 = vmatprep.subr.bf16.mxu0 0
        %811 = vmatpush1.bf16.xpose.msra.mxu0 0
        %812 = vmatprep.subr.bf16.mxu0 0
        %813 = vmatpush1.bf16.xpose.msra.mxu0 0
        %814 = vmatprep.subr.bf16.mxu0 0
        %815 = vmatpush1.bf16.xpose.msra.mxu0 0
        %816 = vmatprep.subr.bf16.mxu0 0
        %817 = vmatpush1.bf16.xpose.msra.mxu0 0
        %818 = vmatprep.subr.bf16.mxu0 0
        %819 = vmatpush1.bf16.xpose.msra.mxu0 0
        %820 = vmatprep.subr.bf16.mxu0 0
        %821 = vmatpush1.bf16.xpose.msra.mxu0 0
        %822 = vmatprep.subr.bf16.mxu0 0
        %823 = vmatpush1.bf16.xpose.msra.mxu0 0
        %824 = vmatprep.subr.bf16.mxu0 0
        %825 = vmatpush1.bf16.xpose.msra.mxu0 0
        %826 = vmatprep.subr.bf16.mxu0 0
        %827 = vmatpush1.bf16.xpose.msra.mxu0 0
        %828 = vmatprep.mubr.bf16.mxu0 0
        %829 = vmatmul.mubr.bf16.gmra.mrb[0].mxu0 %v791
        %v830 = vpop.f32.mrb[0].mxu0
        %v831 = vadd.f32 %v440, %v830
        %v832 = vpop.f32.mrb[0].mxu0
        %v833 = vpop.f32.mrb[0].mxu0
        %v834 = vpop.f32.mrb[0].mxu0
        %835 = vdwg.mxu0
        %v836 = vsel %vm445, %v831, -inf
        %837 = vmax.xlane.f32.xlu0 %v836
        %v838 = vpop.xlane.xlu0 %837
        %v839 = vsub.f32 %v831, %v838
        %v840 = vmul.f32 %v839, 1.442695
        %v841 = vpow.pop %v840
        %v842 = vsel %vm445, %v841, 0.0
        %843 = vadd.xlane.f32.xlu0 %v842
        %v844 = vpop.xlane.xlu0 %843
        %v845 = vpack.c.bf16 %v841, %v841
        %846 = vrot.lane.b32.xlu0 %v434, 40
        %v847 = vpop.permute.xlu0 %846
        %v849 = vsel %vm445, %v845, 0
        %v852 = vsel %vm507, %v847, 0
        %854 = vmatprep.subr.bf16.mxu0 0
        %855 = vmatpush1.bf16.msra.mxu0 %v852
        %856 = vmatprep.subr.bf16.mxu0 0
        %857 = vmatpush1.bf16.msra.mxu0 0
        %858 = vmatprep.subr.bf16.mxu0 0
        %859 = vmatpush1.bf16.msra.mxu0 0
        %860 = vmatprep.subr.bf16.mxu0 0
        %861 = vmatpush1.bf16.msra.mxu0 0
        %862 = vmatprep.subr.bf16.mxu0 0
        %863 = vmatpush1.bf16.msra.mxu0 0
        %864 = vmatprep.subr.bf16.mxu0 0
        %865 = vmatpush1.bf16.msra.mxu0 0
        %866 = vmatprep.subr.bf16.mxu0 0
        %867 = vmatpush1.bf16.msra.mxu0 0
        %868 = vmatprep.subr.bf16.mxu0 0
        %869 = vmatpush1.bf16.msra.mxu0 0
        %870 = vmatprep.subr.bf16.mxu0 0
        %871 = vmatpush1.bf16.msra.mxu0 0
        %872 = vmatprep.subr.bf16.mxu0 0
        %873 = vmatpush1.bf16.msra.mxu0 0
        %874 = vmatprep.subr.bf16.mxu0 0
        %875 = vmatpush1.bf16.msra.mxu0 0
        %876 = vmatprep.subr.bf16.mxu0 0
        %877 = vmatpush1.bf16.msra.mxu0 0
        %878 = vmatprep.subr.bf16.mxu0 0
        %879 = vmatpush1.bf16.msra.mxu0 0
        %880 = vmatprep.subr.bf16.mxu0 0
        %881 = vmatpush1.bf16.msra.mxu0 0
        %882 = vmatprep.subr.bf16.mxu0 0
        %883 = vmatpush1.bf16.msra.mxu0 0
        %884 = vmatprep.subr.bf16.mxu0 0
        %885 = vmatpush1.bf16.msra.mxu0 0
        %886 = vmatprep.mubr.bf16.mxu0 0
        %887 = vmatmul.mubr.bf16.gmra.mrb[0].mxu0 %v849
        %v888 = vpop.f32.mrb[0].mxu0
        %v889 = vadd.f32 0.0, %v888
        %v890 = vpop.f32.mrb[0].mxu0
        %v891 = vpop.f32.mrb[0].mxu0
        %v892 = vpop.f32.mrb[0].mxu0
        %893 = vdwg.mxu0
        %v894 = vrcp.pop %v844
        %v895 = vmul.f32 %v889, %v894
        %897 = vrot.lane.b32.xlu0 %v895, 24
        %v898 = vpop.permute.xlu0 %897
        %vm900 = vcmask 261312
        %901 = vst.msk [vmem:[#allocation2] sm:$0xff] %vm900, %v898
        %v902 = vld [vmem:[#allocation2] sm:$0xff]
        %v903 = vpack.c.bf16 %v902, %v902
        %v904 = vld [vmem:[#allocation8] sm:$0xf]
        %v905 = vld [vmem:[#allocation8 + $0x4] sm:$0xf]
        %v906 = vld [vmem:[#allocation8 + $0x8] sm:$0xf]
        %v907 = vld [vmem:[#allocation8 + $0xc] sm:$0xf]
        %v908 = vld [vmem:[%s5] sm:$0x1]
        %v910 = vlaneseq
        %v911 = vshrl.u32 %v910, 7
        %v912 = vsub.s32 0, %v911
        %v913 = vrot.slane %v908, %v912
        %v919 = vunpack.c.l.b16 %v904
        %v920 = vunpack.c.l.b16 %v905
        %v921 = vunpack.c.l.b16 %v906
        %v922 = vunpack.c.l.b16 %v907
        %v923 = vpack.c.b16 %v920, %v919
        %v924 = vpack.c.b16 %v922, %v921
        %v928 = vsel %vm390, %v903, 0
        %930 = vmatprep.subr.bf16.mxu0 0
        %931 = vmatpush1.bf16.msra.mxu0 %v923
        %932 = vmatprep.subr.bf16.mxu0 0
        %933 = vmatpush1.bf16.msra.mxu0 %v924
        %934 = vmatprep.subr.bf16.mxu0 0
        %935 = vmatpush1.bf16.msra.mxu0 0
        %936 = vmatprep.subr.bf16.mxu0 0
        %937 = vmatpush1.bf16.msra.mxu0 0
        %938 = vmatprep.subr.bf16.mxu0 0
        %939 = vmatpush1.bf16.msra.mxu0 0
        %940 = vmatprep.subr.bf16.mxu0 0
        %941 = vmatpush1.bf16.msra.mxu0 0
        %942 = vmatprep.subr.bf16.mxu0 0
        %943 = vmatpush1.bf16.msra.mxu0 0
        %944 = vmatprep.subr.bf16.mxu0 0
        %945 = vmatpush1.bf16.msra.mxu0 0
        %946 = vmatprep.subr.bf16.mxu0 0
        %947 = vmatpush1.bf16.msra.mxu0 0
        %948 = vmatprep.subr.bf16.mxu0 0
        %949 = vmatpush1.bf16.msra.mxu0 0
        %950 = vmatprep.subr.bf16.mxu0 0
        %951 = vmatpush1.bf16.msra.mxu0 0
        %952 = vmatprep.subr.bf16.mxu0 0
        %953 = vmatpush1.bf16.msra.mxu0 0
        %954 = vmatprep.subr.bf16.mxu0 0
        %955 = vmatpush1.bf16.msra.mxu0 0
        %956 = vmatprep.subr.bf16.mxu0 0
        %957 = vmatpush1.bf16.msra.mxu0 0
        %958 = vmatprep.subr.bf16.mxu0 0
        %959 = vmatpush1.bf16.msra.mxu0 0
        %960 = vmatprep.subr.bf16.mxu0 0
        %961 = vmatpush1.bf16.msra.mxu0 0
        %962 = vmatprep.mubr.bf16.mxu0 0
        %963 = vmatmul.mubr.bf16.gmra.mrb[0].mxu0 %v928
        %v964 = vpop.f32.mrb[0].mxu0
        %v965 = vadd.f32 %v913, %v964
        %v966 = vpop.f32.mrb[0].mxu0
        %v967 = vpop.f32.mrb[0].mxu0
        %v968 = vpop.f32.mrb[0].mxu0
        %969 = vdwg.mxu0
        %v970 = vadd.f32 %v365, %v965
        %v971 = vsel %vm390, %v970, 0.0
        %972 = vadd.xlane.f32.xlu0 %v971
        %v973 = vpop.xlane.xlu0 %972
        %v974 = vrcp.pop 32.0
        %v975 = vmul.f32 %v973, %v974
        %v976 = vsub.f32 %v970, %v975
        %v977 = vmul.f32 %v976, %v976
        %v978 = vsel %vm390, %v977, 0.0
        %979 = vadd.xlane.f32.xlu0 %v978
        %v980 = vpop.xlane.xlu0 %979
        %v981 = vmul.f32 %v980, %v974
        %v982 = vadd.f32 %v981, 1e-05
        %v983 = vrsqrt.pop %v982
        %v984 = vmul.f32 %v976, %v983
        %v985 = vld [vmem:[%s6] sm:$0x1]
        %v987 = vlaneseq
        %v988 = vshrl.u32 %v987, 7
        %v989 = vsub.s32 0, %v988
        %v990 = vrot.slane %v985, %v989
        %v992 = vmul.f32 %v984, %v990
        %v993 = vld [vmem:[%s7] sm:$0x1]
        %v995 = vlaneseq
        %v996 = vshrl.u32 %v995, 7
        %v997 = vsub.s32 0, %v996
        %v998 = vrot.slane %v993, %v997
        %v1000 = vadd.f32 %v992, %v998
        %1001 = vst.msk [vmem:[%s360] sm:$0xff] %vm390, %v1000
        %s1002 = sand.u32 %s212, 1
        %s1003 = scalar_lea.sflag [#allocation5], %s1002
        %s1004 = sand.u32 %s212, 1
        %s1005 = smul.addr %s1004, 8
        %s1006 = scalar_lea.vmem [#allocation9], %s1005
        // Predicated region
        $region65: #{tpu_custom_call.1} parent=51 // pred_check
          %p1007 = pneg %p222
        $region66: #{tpu_custom_call.1} parent=51 // pred_check_branch
          %1009 = sbr.rel (%p1007) target = $region68
        $region67: #{tpu_custom_call.1} parent=51 // pred_region
          %s1011 = ssub.s32 128, 128
          %1012 = vsyncadd %s1003, %s1011
          %s1013 = smul.addr %s26, 128
          %s1014 = scalar_lea.hbm %s8, %s1013
          %s1016 = sshll.u32 %s1006, 4
          %s1017 = int_to_ptr.vmem [resolvable:$true] %s1016
          %1019 = dma.vmem_to_hbm [thread:$0]  %s1017, 128, %s1014, %s1003
        $region68: #{tpu_custom_call.1} parent=51 // pred_fallthru
          _
      $region52: #{tpu_custom_call.1} parent=5 // pred_fallthru
        _
      %p1020 = scmp.le.s32.totalorder 2, %s21
      // Predicated region
      $region69: #{tpu_custom_call.1} parent=5 // pred_check
        %p1021 = pneg %p1020
      $region70: #{tpu_custom_call.1} parent=5 // pred_check_branch
        %1023 = sbr.rel (%p1021) target = $region72
      $region71: #{tpu_custom_call.1} parent=5 // pred_region
        %s1024 = ssub.s32 %s21, 2
        // Predicated region
        $region73: #{tpu_custom_call.1} parent=71 // pred_check
          %p1025 = pneg %p228
        $region74: #{tpu_custom_call.1} parent=71 // pred_check_branch
          %1027 = sbr.rel (%p1025) target = $region76
        $region75: #{tpu_custom_call.1} parent=71 // pred_region
          %s1028 = sand.u32 %s213, 1
          %s1029 = scalar_lea.sflag [#allocation5], %s1028
          %s1030 = sand.u32 %s213, 1
          %s1031 = smul.addr %s1030, 8
          %s1032 = scalar_lea.vmem [#allocation9], %s1031
          %1033 = dma.done %s1029, 128
        $region76: #{tpu_custom_call.1} parent=71 // pred_fallthru
          _
      $region72: #{tpu_custom_call.1} parent=5 // pred_fallthru
        _
    $region6: #{tpu_custom_call.1} parent=1 // loop_footer
      %s25 = sadd.s32 1, %s21
    $region7: #{tpu_custom_call.1} parent=1 // loop_footer_branch
      %20 = sbr.rel target = $region3
    $region8: #{tpu_custom_call.1} parent=1 // loop_exit
      _
    %1034 = vsyncpa [#allocation4], 1
    %s1035 = scalar_lea.sflag [#allocation4], 1
    %1036 = vsyncpa %s1035, 1
    %1037 = vsyncpa [#allocation7], 1
    %1038 = vsyncpa [#allocation5], 1
    %s1039 = scalar_lea.sflag [#allocation5], 1
    %1040 = vsyncpa %s1039, 1

</llo_original>
